<compile_context>
chip_gen: v7x
topology: tpu7x:2x2x1
jax: 0.10.0
libtpu: 0.0.40
codegen_flags: <defaults>
</compile_context>

<pallas_src>
import functools

import jax
import jax.numpy as jnp
from jax.experimental import pallas as pl
from jax.experimental.pallas import tpu as pltpu


def _round_up(x, m):
    return (x + m - 1) // m * m


def _gnn_layer_kernel(adj_ref, h_k_ref, h_row_ref, w_ref, b_ref, o_ref, acc_ref,
                      *, aggregation, in_dim):
    """One (row_tile, k_tile) grid step.

    adj_ref:   (TM, TK)        bf16 0/1 adjacency tile
    h_k_ref:   (TK, in_dim_p)  f32 features for this K tile (col `in_dim` is all-ones)
    h_row_ref: (TM, in_dim_p)  f32 features for this row tile (residual path)
    w_ref:     (in_dim_p, out_dim_p) f32 (transposed, zero-padded nn.Linear weight)
    b_ref:     (1, out_dim_p)  f32 zero-padded bias
    o_ref:     (TM, out_dim_p) f32 output tile (resident across K)
    acc_ref:   (TM, in_dim_p)  f32 scratch accumulator (col `in_dim` accumulates degree)
    """
    k = pl.program_id(1)

    @pl.when(k == 0)
    def _init():
        acc_ref[...] = jnp.zeros_like(acc_ref)

    # Partial aggregation for this K tile on the MXU. The ones column of h folds the
    # degree computation into the same matmul pass (no separate XLU reduction).
    acc_ref[...] += jnp.dot(adj_ref[...], h_k_ref[...],
                            preferred_element_type=jnp.float32)

    @pl.when(k == pl.num_programs(1) - 1)
    def _finalize():
        acc = acc_ref[...]                                   # (TM, in_dim_p)
        if aggregation == "mean":
            deg = acc[:, in_dim:in_dim + 1]                  # fused degree column
            deg_c = jnp.maximum(deg, 1.0)
            inv = pl.reciprocal(deg_c, approx=True)          # EUP
            inv = inv * (2.0 - deg_c * inv)                  # one Newton step -> ~f32 exact
            agg = acc * inv                                  # deg==0 rows stay 0 (acc row is 0)
        else:  # "sum": zero adjacency rows already aggregate to zero; no mask needed
            agg = acc

        combined = h_row_ref[...] + agg
        out = jnp.dot(combined, w_ref[...],
                      preferred_element_type=jnp.float32) + b_ref[...]
        o_ref[...] = out.astype(o_ref.dtype)


def gnn_layer(h, edge_index, weight_t, bias, *, aggregation="mean", tm=256, tk=512):
    """h: (N, in_dim), edge_index: (2, E) int32, weight_t: (in_dim, out_dim), bias: (out_dim,)."""
    if aggregation not in ("mean", "sum"):
        # TODO(synk): 'max'/'min' aggregation (masked extremum over neighbors) has no clean
        # dense-matmul formulation; not implemented in-kernel -> fail loudly, never silently.
        raise NotImplementedError(f"aggregation={aggregation!r} is not implemented")

    assert tk % tm == 0, "tk must be a multiple of tm so one padded N works for both axes"

    n, in_dim = h.shape
    out_dim = weight_t.shape[1]

    n_p = _round_up(max(n, 1), tk)             # divisible by both tm and tk
    in_dim_p = _round_up(in_dim + 1, 128)      # +1 lane reserved for the fused degree column
    out_dim_p = _round_up(out_dim, 128)        # lane-dense output stores

    # Symmetric 0/1 adjacency, built directly in bf16 (exact), zero-padded to (n_p, n_p).
    adj = jnp.zeros((n_p, n_p), dtype=jnp.bfloat16)
    adj = adj.at[edge_index[0], edge_index[1]].set(1.0)
    adj = adj.at[edge_index[1], edge_index[0]].set(1.0)

    # Padded features with the all-ones degree column at lane `in_dim`.
    h_aug = jnp.zeros((n_p, in_dim_p), dtype=jnp.float32)
    h_aug = h_aug.at[:n, :in_dim].set(h.astype(jnp.float32))
    h_aug = h_aug.at[:, in_dim].set(1.0)

    w_p = jnp.zeros((in_dim_p, out_dim_p), dtype=jnp.float32)
    w_p = w_p.at[:in_dim, :out_dim].set(weight_t.astype(jnp.float32))
    b_p = jnp.zeros((1, out_dim_p), dtype=jnp.float32)
    b_p = b_p.at[0, :out_dim].set(bias.astype(jnp.float32))

    grid = (n_p // tm, n_p // tk)
    kernel = functools.partial(_gnn_layer_kernel, aggregation=aggregation, in_dim=in_dim)

    flops = int(2 * n_p * n_p * in_dim_p + 2 * n_p * in_dim_p * out_dim_p)
    bytes_accessed = int(n_p * n_p * 2                 # adj (bf16)
                         + 2 * n_p * in_dim_p * 4      # h_aug read twice (K tiles + row tiles)
                         + in_dim_p * out_dim_p * 4    # W
                         + out_dim_p * 4               # bias
                         + n_p * out_dim_p * 4)        # output

    out = pl.pallas_call(
        kernel,
        out_shape=jax.ShapeDtypeStruct((n_p, out_dim_p), jnp.float32),
        grid_spec=pltpu.PrefetchScalarGridSpec(
            num_scalar_prefetch=0,
            grid=grid,
            in_specs=[
                pl.BlockSpec((tm, tk), lambda i, k: (i, k)),               # adj tile
                pl.BlockSpec((tk, in_dim_p), lambda i, k: (k, 0)),         # h K-tile (aggregation)
                pl.BlockSpec((tm, in_dim_p), lambda i, k: (i, 0)),         # h row-tile (residual)
                pl.BlockSpec((in_dim_p, out_dim_p), lambda i, k: (0, 0)),  # W (resident)
                pl.BlockSpec((1, out_dim_p), lambda i, k: (0, 0)),         # bias (resident)
            ],
            out_specs=pl.BlockSpec((tm, out_dim_p), lambda i, k: (i, 0)),
            scratch_shapes=[pltpu.VMEM((tm, in_dim_p), jnp.float32)],
        ),
        compiler_params=pltpu.CompilerParams(
            dimension_semantics=("parallel", "arbitrary"),
            vmem_limit_bytes=48 * 1024 * 1024,
        ),
        cost_estimate=pl.CostEstimate(flops=flops, transcendentals=n_p,
                                      bytes_accessed=bytes_accessed),
    )(adj, h_aug, h_aug, w_p, b_p)

    return out[:n, :out_dim]


def _reference(h, edge_index, weight_t, bias, aggregation="mean"):
    n = h.shape[0]
    adj = jnp.zeros((n, n), dtype=jnp.float32)
    adj = adj.at[edge_index[0], edge_index[1]].set(1.0)
    adj = adj.at[edge_index[1], edge_index[0]].set(1.0)
    deg = adj.sum(axis=1, keepdims=True)
    agg_sum = adj @ h
    if aggregation == "mean":
        agg = jnp.where(deg > 0, agg_sum / jnp.maximum(deg, 1.0), 0.0)
    else:  # sum
        agg = agg_sum
    combined = h + agg
    return combined @ weight_t + bias[None, :]


if __name__ == "__main__":
    key = jax.random.PRNGKey(0)
    N, E, in_dim, out_dim = 8, 10, 32, 32

    k_h, k_e, k_w, k_b = jax.random.split(key, 4)
    h = jax.random.normal(k_h, (N, in_dim), dtype=jnp.float32)
    edge_index = jax.random.randint(k_e, (2, E), 0, N, dtype=jnp.int32)

    # nn.Linear-style init: U(-1/sqrt(in_dim), 1/sqrt(in_dim))
    bound = 1.0 / jnp.sqrt(jnp.float32(in_dim))
    weight = jax.random.uniform(k_w, (out_dim, in_dim), minval=-bound, maxval=bound,
                                dtype=jnp.float32)
    bias = jax.random.uniform(k_b, (out_dim,), minval=-bound, maxval=bound,
                              dtype=jnp.float32)
    weight_t = weight.T  # (in_dim, out_dim)

    for agg in ("mean", "sum"):
        out = gnn_layer(h, edge_index, weight_t, bias, aggregation=agg)
        out = jax.block_until_ready(out)
        ref = _reference(h, edge_index, weight_t, bias, aggregation=agg)
        assert out.shape == (N, out_dim)
        assert jnp.allclose(out, ref, atol=1e-3, rtol=1e-3), f"mismatch vs reference ({agg})"

    print("KERNEL_OK")
</pallas_src>

<mosaic_0001>
module attributes {stable_mosaic.version = 11 : i64} {
  func.func @_gnn_layer_kernel(%arg0: i32, %arg1: i32, %arg2: memref<256x512xbf16, #tpu.memory_space<vmem>>, %arg3: memref<512x128xf32, #tpu.memory_space<vmem>>, %arg4: memref<256x128xf32, #tpu.memory_space<vmem>>, %arg5: memref<128x128xf32, #tpu.memory_space<vmem>>, %arg6: memref<1x128xf32, #tpu.memory_space<vmem>>, %arg7: memref<256x128xf32, #tpu.memory_space<vmem>>, %arg8: memref<256x128xf32, #tpu.memory_space<vmem>>) attributes {dimension_semantics = [#tpu.dimension_semantics<parallel>, #tpu.dimension_semantics<arbitrary>], iteration_bounds = array<i64: 2, 1>, scalar_prefetch = 0 : i64, scratch_operands = 1 : i64, tpu.core_type = #tpu.core_type<tc>, window_params = [{transform_indices = @transform_0, window_bounds = array<i64: 256, 512>}, {transform_indices = @transform_1, window_bounds = array<i64: 512, 128>}, {transform_indices = @transform_2, window_bounds = array<i64: 256, 128>}, {pipeline_mode = #tpu.pipeline_mode<synchronous>, transform_indices = @transform_3, window_bounds = array<i64: 128, 128>}, {pipeline_mode = #tpu.pipeline_mode<synchronous>, transform_indices = @transform_4, window_bounds = array<i64: 1, 128>}, {transform_indices = @transform_5, window_bounds = array<i64: 256, 128>}]} {
    %c0_i32 = arith.constant 0 : i32
    %0 = arith.cmpi eq, %arg1, %c0_i32 : i32
    %1 = arith.extui %0 : i1 to i32
    %c0_i32_0 = arith.constant 0 : i32
    %2 = arith.cmpi ne, %1, %c0_i32_0 : i32
    scf.if %2 {
      %cst_10 = arith.constant 0.000000e+00 : f32
      %12 = vector.broadcast %cst_10 : f32 to vector<256x128xf32>
      %c0_11 = arith.constant 0 : index
      %c0_12 = arith.constant 0 : index
      %13 = vector.load %arg8[%c0_11, %c0_12] : memref<256x128xf32, #tpu.memory_space<vmem>>, vector<256x128xf32>
      tpu.vector_store %arg8[%c0_11, %c0_12], %12 {strides = array<i32>} : memref<256x128xf32, #tpu.memory_space<vmem>>, vector<256x128xf32>,
    } else {
    }
    %c0 = arith.constant 0 : index
    %c0_1 = arith.constant 0 : index
    %3 = vector.load %arg8[%c0, %c0_1] : memref<256x128xf32, #tpu.memory_space<vmem>>, vector<256x128xf32>
    %c0_2 = arith.constant 0 : index
    %c0_3 = arith.constant 0 : index
    %4 = vector.load %arg2[%c0_2, %c0_3] : memref<256x512xbf16, #tpu.memory_space<vmem>>, vector<256x512xbf16>
    %c0_4 = arith.constant 0 : index
    %c0_5 = arith.constant 0 : index
    %5 = vector.load %arg3[%c0_4, %c0_5] : memref<512x128xf32, #tpu.memory_space<vmem>>, vector<512x128xf32>
    %cst = arith.constant dense<0.000000e+00> : vector<256x128xf32>
    %6 = tpu.matmul %4, %5, %cst {dimension_numbers = #tpu.dot_dimension_numbers<[1], [0], [0], [1], [0, 0, 1, 1], [], []>} : vector<256x512xbf16>, vector<512x128xf32>, vector<256x128xf32> -> vector<256x128xf32>
    %7 = arith.addf %3, %6 : vector<256x128xf32>
    %c0_6 = arith.constant 0 : index
    %c0_7 = arith.constant 0 : index
    %8 = vector.load %arg8[%c0_6, %c0_7] : memref<256x128xf32, #tpu.memory_space<vmem>>, vector<256x128xf32>
    tpu.vector_store %arg8[%c0_6, %c0_7], %7 {strides = array<i32>} : memref<256x128xf32, #tpu.memory_space<vmem>>, vector<256x128xf32>,
    %c0_i32_8 = arith.constant 0 : i32
    %9 = arith.cmpi eq, %arg1, %c0_i32_8 : i32
    %10 = arith.extui %9 : i1 to i32
    %c0_i32_9 = arith.constant 0 : i32
    %11 = arith.cmpi ne, %10, %c0_i32_9 : i32
    scf.if %11 {
      %c0_10 = arith.constant 0 : index
      %c0_11 = arith.constant 0 : index
      %12 = vector.load %arg8[%c0_10, %c0_11] : memref<256x128xf32, #tpu.memory_space<vmem>>, vector<256x128xf32>
      %13 = vector.extract_strided_slice %12 {offsets = [0, 32], sizes = [256, 1], strides = [1, 1]} : vector<256x128xf32> to vector<256x1xf32>
      %cst_12 = arith.constant 1.000000e+00 : f32
      %14 = vector.broadcast %cst_12 : f32 to vector<256x1xf32>
      %15 = arith.maximumf %13, %14 : vector<256x1xf32>
      %16 = tpu.reciprocal %15 {approx = true} : vector<256x1xf32> -> vector<256x1xf32>
      %17 = arith.mulf %15, %16 : vector<256x1xf32>
      %cst_13 = arith.constant 2.000000e+00 : f32
      %18 = vector.broadcast %cst_13 : f32 to vector<256x1xf32>
      %19 = arith.subf %18, %17 : vector<256x1xf32>
      %20 = arith.mulf %16, %19 : vector<256x1xf32>
      %21 = vector.broadcast %20 : vector<256x1xf32> to vector<256x128xf32>
      %22 = arith.mulf %12, %21 : vector<256x128xf32>
      %c0_14 = arith.constant 0 : index
      %c0_15 = arith.constant 0 : index
      %23 = vector.load %arg4[%c0_14, %c0_15] : memref<256x128xf32, #tpu.memory_space<vmem>>, vector<256x128xf32>
      %24 = arith.addf %23, %22 : vector<256x128xf32>
      %c0_16 = arith.constant 0 : index
      %c0_17 = arith.constant 0 : index
      %25 = vector.load %arg5[%c0_16, %c0_17] : memref<128x128xf32, #tpu.memory_space<vmem>>, vector<128x128xf32>
      %cst_18 = arith.constant dense<0.000000e+00> : vector<256x128xf32>
      %26 = tpu.matmul %24, %25, %cst_18 {dimension_numbers = #tpu.dot_dimension_numbers<[1], [0], [0], [1], [0, 0, 1, 1], [], []>} : vector<256x128xf32>, vector<128x128xf32>, vector<256x128xf32> -> vector<256x128xf32>
      %c0_19 = arith.constant 0 : index
      %c0_20 = arith.constant 0 : index
      %27 = vector.load %arg6[%c0_19, %c0_20] : memref<1x128xf32, #tpu.memory_space<vmem>>, vector<1x128xf32>
      %28 = vector.broadcast %27 : vector<1x128xf32> to vector<256x128xf32>
      %29 = arith.addf %26, %28 : vector<256x128xf32>
      %c0_21 = arith.constant 0 : index
      %c0_22 = arith.constant 0 : index
      %30 = vector.load %arg7[%c0_21, %c0_22] : memref<256x128xf32, #tpu.memory_space<vmem>>, vector<256x128xf32>
      tpu.vector_store %arg7[%c0_21, %c0_22], %29 {strides = array<i32>} : memref<256x128xf32, #tpu.memory_space<vmem>>, vector<256x128xf32>,
    } else {
    }
    return
  }
  func.func @transform_0(%arg0: i32, %arg1: i32) -> (i32, i32) {
    %c0_i32 = arith.constant 0 : i32
    return %arg0, %arg1 : i32, i32
  }
  func.func @transform_1(%arg0: i32, %arg1: i32) -> (i32, i32) {
    %c0_i32 = arith.constant 0 : i32
    %c0_i32_0 = arith.constant 0 : i32
    return %arg1, %c0_i32 : i32, i32
  }
  func.func @transform_2(%arg0: i32, %arg1: i32) -> (i32, i32) {
    %c0_i32 = arith.constant 0 : i32
    %c0_i32_0 = arith.constant 0 : i32
    return %arg0, %c0_i32 : i32, i32
  }
  func.func @transform_3(%arg0: i32, %arg1: i32) -> (i32, i32) {
    %c0_i32 = arith.constant 0 : i32
    %c0_i32_0 = arith.constant 0 : i32
    %c0_i32_1 = arith.constant 0 : i32
    return %c0_i32, %c0_i32_0 : i32, i32
  }
  func.func @transform_4(%arg0: i32, %arg1: i32) -> (i32, i32) {
    %c0_i32 = arith.constant 0 : i32
    %c0_i32_0 = arith.constant 0 : i32
    %c0_i32_1 = arith.constant 0 : i32
    return %c0_i32, %c0_i32_0 : i32, i32
  }
  func.func @transform_5(%arg0: i32, %arg1: i32) -> (i32, i32) {
    %c0_i32 = arith.constant 0 : i32
    %c0_i32_0 = arith.constant 0 : i32
    return %arg0, %c0_i32 : i32, i32
  }
}

</mosaic_0001>

<llo_original>
// kernel: tpu_custom_call.1
$region0: #{tpu_custom_call.1}
  #allocation0 [shape = 'u32[]', space=smem, size = 0x4, offset = 0x4, fixed_abs, tag = 'smem constant byte address 0x4 - core index']
  #allocation1 [shape = 'u32[144,128]{1,0:T(1,128)}', space=vmem, size = 0x12000, scoped, tag = 'internal scratch']
  #allocation2 [shape = 'f32[256,128]{1,0:T(8,128)}', space=vmem, size = 0x20000, scoped, tag = 'scratch operand']
  %s0 = inlined_call_operand.hbm [shape: bf16[512,512], index: 0, kind: input, shape index: {}]
  %s1 = inlined_call_operand.hbm [shape: f32[512,128], index: 1, kind: input, shape index: {}]
  %s2 = inlined_call_operand.hbm [shape: f32[512,128], index: 2, kind: input, shape index: {}]
  %s3 = inlined_call_operand.hbm [shape: f32[128,128], index: 3, kind: input, shape index: {}]
  %s4 = inlined_call_operand.vmem [shape: f32[1,128], index: 4, kind: input, shape index: {}]
  %s5 = inlined_call_operand.hbm [shape: f32[512,128], index: 5, kind: output, shape index: {}]
  %s6 = sld [smem:[#allocation0]]
  $region77: #{tpu_custom_call.1} parent=0
    _
  %s8 = ssub.s32 1, %s6
  %s9 = scalar_select 0, %s8, %s6
  $region1: #{tpu_custom_call.1} parent=0
    #allocation3 [shape = 'u8[524288]{0}', space=vmem, size = 0x80000, scoped, tag = 'input window, operand 0']
    #allocation4 [shape = 's32[2]{0}', space=sflag, size = 0x8, scoped, tag = 'scoped memory for tpu_custom_call.1']
    #allocation5 [shape = 's32[2]{0}', space=sflag, size = 0x8, scoped, tag = 'scoped memory for tpu_custom_call.1']
    #allocation6 [shape = 'u8[262144]{0}', space=vmem, size = 0x40000, scoped, tag = 'input window, operand 1, single buffered']
    #allocation7 [shape = 's32[1]{0}', space=sflag, size = 0x4, scoped, tag = 'scoped memory for tpu_custom_call.1']
    #allocation8 [shape = 'u8[262144]{0}', space=vmem, size = 0x40000, scoped, tag = 'input window, operand 2']
    #allocation9 [shape = 'u8[65536]{0}', space=vmem, size = 0x10000, scoped, tag = 'input window, operand 3, single buffered']
    #allocation10 [shape = 'u8[262144]{0}', space=vmem, size = 0x40000, scoped, tag = 'output window, operand 0']
    %10 = vsyncpa [#allocation4], 0
    %s11 = scalar_lea.sflag [#allocation4], 1
    %12 = vsyncpa %s11, 0
    %13 = vsyncpa [#allocation7], 0
    %14 = vsyncpa [#allocation5], 0
    %s15 = scalar_lea.sflag [#allocation5], 1
    %16 = vsyncpa %s15, 0
    loop: start=0, step=1, limit=4
    $region2: #{tpu_custom_call.1} parent=1 // loop_pre_header
      _
    $region3: #{tpu_custom_call.1} parent=1 // loop_header
      %s18 = sphi 0, %s22
      %p19 = scmp.ge.s32.totalorder %s18, 4
      %s25 = sphi 0, %s37
      %s26 = sphi 0, %s33
      %s27 = sphi 0, %s25
      %s28 = sphi 0, %s26
      %s29 = sphi 0, %s27
      %s30 = sphi 0, %s28
      %s42 = sphi 0, %s44
      %s45 = sphi 0, %s42
      %s46 = sphi 0, %s45
      %s62 = sphi 0, %s46
      %s68 = sphi 0, %s70
      %s71 = sphi 0, %s68
      %s72 = sphi 0, %s71
      %s88 = sphi 0, %s72
      %s94 = sphi 0, %s96
      %s97 = sphi 0, %s94
      %s98 = sphi 0, %s97
      %s114 = sphi 0, %s98
      %s118 = sphi 0, %s118
      %s120 = sphi 0, %s118
      %s121 = sphi 0, %s120
      %s135 = sphi 0, %s121
      %s139 = sphi 0, %s139
      %s141 = sphi 0, %s139
      %s142 = sphi 0, %s141
      %s156 = sphi 0, %s142
      %s162 = sphi 0, %s164
      %s165 = sphi 0, %s162
      %s166 = sphi 0, %s165
      %s182 = sphi 0, %s166
    $region4: #{tpu_custom_call.1} parent=1 // loop_header_branch
      %21 = sbr.rel (%p19) target = $region8
    $region5: #{tpu_custom_call.1} parent=1 // loop_body
      %s23 = ssub.s32 %s18, 1
      %s24 = ssub.s32 %s18, 2
      %s31 = sadd.s32 1, %s26
      %p32 = scmp.ge.s32.totalorder %s31, 1
      %s33 = scalar_select %p32, 0, %s31
      %s34 = sadd.s32 1, %s25
      %s35 = scalar_select %p32, %s34, %s25
      %p36 = scmp.ge.s32.totalorder %s35, 2
      %s37 = scalar_select %p36, 0, %s35
      %s38 = ssub.s32 %s25, %s37
      %s39 = ssub.s32 %s26, %s33
      %s40 = sor.u32 %s38, %s39
      %p41 = scmp.eq.s32.totalorder %s40, 0
      %s43 = sadd.s32 %s42, 1
      %s44 = scalar_select %p41, %s42, %s43
      %p47 = pneg %p41
      %p48 = scmp.eq.s32.totalorder %s18, 1
      %p49 = por %p47, %p48
      %p50 = scmp.ne.s32.totalorder %s42, %s45
      %p51 = scmp.eq.s32.totalorder %s18, 0
      %p52 = por %p50, %p51
      %p53 = scmp.ne.s32.totalorder %s42, %s45
      %p54 = scmp.eq.s32.totalorder %s23, 1
      %p55 = por %p53, %p54
      %p56 = scmp.ne.s32.totalorder %s45, %s46
      %p57 = scmp.eq.s32.totalorder %s23, 0
      %p58 = por %p56, %p57
      %p59 = scmp.ne.s32.totalorder %s45, %s46
      %p60 = scmp.eq.s32.totalorder %s24, 1
      %p61 = por %p59, %p60
      %p63 = scmp.ne.s32.totalorder %s46, %s62
      %p64 = scmp.eq.s32.totalorder %s24, 0
      %p65 = por %p63, %p64
      %s66 = ssub.s32 %s26, %s33
      %p67 = scmp.eq.s32.totalorder %s66, 0
      %s69 = sadd.s32 %s68, 1
      %s70 = scalar_select %p67, %s68, %s69
      %p73 = pneg %p67
      %p74 = scmp.eq.s32.totalorder %s18, 1
      %p75 = por %p73, %p74
      %p76 = scmp.ne.s32.totalorder %s68, %s71
      %p77 = scmp.eq.s32.totalorder %s18, 0
      %p78 = por %p76, %p77
      %p79 = scmp.ne.s32.totalorder %s68, %s71
      %p80 = scmp.eq.s32.totalorder %s23, 1
      %p81 = por %p79, %p80
      %p82 = scmp.ne.s32.totalorder %s71, %s72
      %p83 = scmp.eq.s32.totalorder %s23, 0
      %p84 = por %p82, %p83
      %p85 = scmp.ne.s32.totalorder %s71, %s72
      %p86 = scmp.eq.s32.totalorder %s24, 1
      %p87 = por %p85, %p86
      %p89 = scmp.ne.s32.totalorder %s72, %s88
      %p90 = scmp.eq.s32.totalorder %s24, 0
      %p91 = por %p89, %p90
      %s92 = ssub.s32 %s25, %s37
      %p93 = scmp.eq.s32.totalorder %s92, 0
      %s95 = sadd.s32 %s94, 1
      %s96 = scalar_select %p93, %s94, %s95
      %p99 = pneg %p93
      %p100 = scmp.eq.s32.totalorder %s18, 1
      %p101 = por %p99, %p100
      %p102 = scmp.ne.s32.totalorder %s94, %s97
      %p103 = scmp.eq.s32.totalorder %s18, 0
      %p104 = por %p102, %p103
      %p105 = scmp.ne.s32.totalorder %s94, %s97
      %p106 = scmp.eq.s32.totalorder %s23, 1
      %p107 = por %p105, %p106
      %p108 = scmp.ne.s32.totalorder %s97, %s98
      %p109 = scmp.eq.s32.totalorder %s23, 0
      %p110 = por %p108, %p109
      %p111 = scmp.ne.s32.totalorder %s97, %s98
      %p112 = scmp.eq.s32.totalorder %s24, 1
      %p113 = por %p111, %p112
      %p115 = scmp.ne.s32.totalorder %s98, %s114
      %p116 = scmp.eq.s32.totalorder %s24, 0
      %p117 = por %p115, %p116
      %s119 = sadd.s32 %s118, 1
      %p122 = scmp.eq.s32.totalorder %s18, 1
      %p123 = scmp.ne.s32.totalorder %s118, %s120
      %p124 = scmp.eq.s32.totalorder %s18, 0
      %p125 = por %p123, %p124
      %p126 = scmp.ne.s32.totalorder %s118, %s120
      %p127 = scmp.eq.s32.totalorder %s23, 1
      %p128 = por %p126, %p127
      %p129 = scmp.ne.s32.totalorder %s120, %s121
      %p130 = scmp.eq.s32.totalorder %s23, 0
      %p131 = por %p129, %p130
      %p132 = scmp.ne.s32.totalorder %s120, %s121
      %p133 = scmp.eq.s32.totalorder %s24, 1
      %p134 = por %p132, %p133
      %p136 = scmp.ne.s32.totalorder %s121, %s135
      %p137 = scmp.eq.s32.totalorder %s24, 0
      %p138 = por %p136, %p137
      %s140 = sadd.s32 %s139, 1
      %p143 = scmp.eq.s32.totalorder %s18, 1
      %p144 = scmp.ne.s32.totalorder %s139, %s141
      %p145 = scmp.eq.s32.totalorder %s18, 0
      %p146 = por %p144, %p145
      %p147 = scmp.ne.s32.totalorder %s139, %s141
      %p148 = scmp.eq.s32.totalorder %s23, 1
      %p149 = por %p147, %p148
      %p150 = scmp.ne.s32.totalorder %s141, %s142
      %p151 = scmp.eq.s32.totalorder %s23, 0
      %p152 = por %p150, %p151
      %p153 = scmp.ne.s32.totalorder %s141, %s142
      %p154 = scmp.eq.s32.totalorder %s24, 1
      %p155 = por %p153, %p154
      %p157 = scmp.ne.s32.totalorder %s142, %s156
      %p158 = scmp.eq.s32.totalorder %s24, 0
      %p159 = por %p157, %p158
      %s160 = ssub.s32 %s25, %s37
      %p161 = scmp.eq.s32.totalorder %s160, 0
      %s163 = sadd.s32 %s162, 1
      %s164 = scalar_select %p161, %s162, %s163
      %p167 = pneg %p161
      %p168 = scmp.eq.s32.totalorder %s18, 1
      %p169 = por %p167, %p168
      %p170 = scmp.ne.s32.totalorder %s162, %s165
      %p171 = scmp.eq.s32.totalorder %s18, 0
      %p172 = por %p170, %p171
      %p173 = scmp.ne.s32.totalorder %s162, %s165
      %p174 = scmp.eq.s32.totalorder %s23, 1
      %p175 = por %p173, %p174
      %p176 = scmp.ne.s32.totalorder %s165, %s166
      %p177 = scmp.eq.s32.totalorder %s23, 0
      %p178 = por %p176, %p177
      %p179 = scmp.ne.s32.totalorder %s165, %s166
      %p180 = scmp.eq.s32.totalorder %s24, 1
      %p181 = por %p179, %p180
      %p183 = scmp.ne.s32.totalorder %s166, %s182
      %p184 = scmp.eq.s32.totalorder %s24, 0
      %p185 = por %p183, %p184
      %p186 = scmp.le.s32.totalorder 1, %s18
      %p187 = scmp.lt.s32.totalorder %s18, 3
      %p188 = pnand %p186, %p187
      %p189 = pneg %p188
      // Predicated region
      $region9: #{tpu_custom_call.1} parent=5 // pred_check
        _
      $region10: #{tpu_custom_call.1} parent=5 // pred_check_branch
        %191 = sbr.rel (%p188) target = $region12
      $region11: #{tpu_custom_call.1} parent=5 // pred_region
        %s192 = ssub.s32 %s18, 1
        // Predicated region
        $region13: #{tpu_custom_call.1} parent=11 // pred_check
          %p193 = pneg %p84
        $region14: #{tpu_custom_call.1} parent=11 // pred_check_branch
          %195 = sbr.rel (%p193) target = $region16
        $region15: #{tpu_custom_call.1} parent=11 // pred_region
          %s196 = smul.u32 64, %s28
          %s198 = ssub.s32 8192, 8192
          %199 = vsyncadd [#allocation7], %s198
          %s200 = smul.addr %s196, 128
          %s201 = scalar_lea.hbm %s1, %s200
          %s202 = sshll.u32 [#allocation6], 4
          %s203 = int_to_ptr.vmem [resolvable:$true] %s202
          %208 = dma.hbm_to_vmem [thread:$0]  %s201, 8192, %s203, [#allocation7], 128, 128, 8
        $region16: #{tpu_custom_call.1} parent=11 // pred_fallthru
          _
        // Predicated region
        $region17: #{tpu_custom_call.1} parent=11 // pred_check
          %p209 = pneg %p131
        $region18: #{tpu_custom_call.1} parent=11 // pred_check_branch
          %211 = sbr.rel (%p209) target = $region20
        $region19: #{tpu_custom_call.1} parent=11 // pred_region
          %s213 = ssub.s32 2048, 2048
          %214 = vsyncadd [#allocation7], %s213
          %s215 = sshll.u32 [#allocation9], 4
          %s216 = int_to_ptr.vmem [resolvable:$true] %s215
          %221 = dma.hbm_to_vmem [thread:$0]  %s3, 2048, %s216, [#allocation7], 128, 128, 8
        $region20: #{tpu_custom_call.1} parent=11 // pred_fallthru
          _
        // Predicated region
        $region21: #{tpu_custom_call.1} parent=11 // pred_check
          %p222 = pneg %p152
        $region22: #{tpu_custom_call.1} parent=11 // pred_check_branch
          %224 = sbr.rel (%p222) target = $region24
        $region23: #{tpu_custom_call.1} parent=11 // pred_region
          _
        $region24: #{tpu_custom_call.1} parent=11 // pred_fallthru
          _
      $region12: #{tpu_custom_call.1} parent=5 // pred_fallthru
        _
      %p225 = scmp.lt.s32.totalorder %s18, 2
      // Predicated region
      $region25: #{tpu_custom_call.1} parent=5 // pred_check
        %p226 = pneg %p225
      $region26: #{tpu_custom_call.1} parent=5 // pred_check_branch
        %228 = sbr.rel (%p226) target = $region28
      $region27: #{tpu_custom_call.1} parent=5 // pred_region
        // Predicated region
        $region29: #{tpu_custom_call.1} parent=27 // pred_check
          %p229 = pneg %p52
        $region30: #{tpu_custom_call.1} parent=27 // pred_check_branch
          %231 = sbr.rel (%p229) target = $region32
        $region31: #{tpu_custom_call.1} parent=27 // pred_region
          %s232 = sand.u32 %s18, 1
          %s233 = scalar_lea.sflag [#allocation4], %s232
          %s234 = sand.u32 %s42, 1
          %s235 = smul.addr %s234, 512
          %s236 = scalar_lea.vmem [#allocation3], %s235
          %s237 = smul.u32 32, %s25
          %s238 = smul.u32 4, %s26
          %s240 = ssub.s32 8192, 8192
          %241 = vsyncadd %s233, %s240
          %s242 = smul.addr %s237, 4
          %s243 = sadd.s32 %s238, %s242
          %s244 = smul.addr %s243, 64
          %s245 = scalar_lea.hbm %s0, %s244
          %s246 = sshll.u32 %s236, 4
          %s247 = int_to_ptr.vmem [resolvable:$true] %s246
          %252 = dma.hbm_to_vmem [thread:$0]  %s245, 8192, %s247, %s233, 256, 256, 16
        $region32: #{tpu_custom_call.1} parent=27 // pred_fallthru
          _
        // Predicated region
        $region33: #{tpu_custom_call.1} parent=27 // pred_check
          %p253 = pneg %p104
        $region34: #{tpu_custom_call.1} parent=27 // pred_check_branch
          %255 = sbr.rel (%p253) target = $region36
        $region35: #{tpu_custom_call.1} parent=27 // pred_region
          %s256 = sand.u32 %s18, 1
          %s257 = scalar_lea.sflag [#allocation4], %s256
          %s258 = sand.u32 %s94, 1
          %s259 = smul.addr %s258, 256
          %s260 = scalar_lea.vmem [#allocation8], %s259
          %s261 = smul.u32 32, %s25
          %s263 = ssub.s32 4096, 4096
          %264 = vsyncadd %s257, %s263
          %s265 = smul.addr %s261, 128
          %s266 = scalar_lea.hbm %s2, %s265
          %s267 = sshll.u32 %s260, 4
          %s268 = int_to_ptr.vmem [resolvable:$true] %s267
          %273 = dma.hbm_to_vmem [thread:$0]  %s266, 4096, %s268, %s257, 128, 128, 8
        $region36: #{tpu_custom_call.1} parent=27 // pred_fallthru
          _
      $region28: #{tpu_custom_call.1} parent=5 // pred_fallthru
        _
      %p274 = scmp.le.s32.totalorder 1, %s18
      %p275 = scmp.lt.s32.totalorder %s18, 3
      %p276 = pnand %p274, %p275
      %p277 = pneg %p276
      // Predicated region
      $region37: #{tpu_custom_call.1} parent=5 // pred_check
        _
      $region38: #{tpu_custom_call.1} parent=5 // pred_check_branch
        %279 = sbr.rel (%p276) target = $region40
      $region39: #{tpu_custom_call.1} parent=5 // pred_region
        %s280 = ssub.s32 %s18, 1
        %s281 = sand.u32 %s23, 1
        %s282 = scalar_lea.sflag [#allocation4], %s281
        %s283 = sand.u32 %s45, 1
        %s284 = smul.addr %s283, 512
        %s285 = scalar_lea.vmem [#allocation3], %s284
        // Predicated region
        $region41: #{tpu_custom_call.1} parent=39 // pred_check
          %p286 = pneg %p58
        $region42: #{tpu_custom_call.1} parent=39 // pred_check_branch
          %288 = sbr.rel (%p286) target = $region44
        $region43: #{tpu_custom_call.1} parent=39 // pred_region
          %289 = dma.done %s282, 8192
        $region44: #{tpu_custom_call.1} parent=39 // pred_fallthru
          _
        // Predicated region
        $region45: #{tpu_custom_call.1} parent=39 // pred_check
          %p290 = pneg %p84
        $region46: #{tpu_custom_call.1} parent=39 // pred_check_branch
          %292 = sbr.rel (%p290) target = $region48
        $region47: #{tpu_custom_call.1} parent=39 // pred_region
          %293 = dma.done [#allocation7], 8192
        $region48: #{tpu_custom_call.1} parent=39 // pred_fallthru
          _
        %s294 = sand.u32 %s23, 1
        %s295 = scalar_lea.sflag [#allocation4], %s294
        %s296 = sand.u32 %s97, 1
        %s297 = smul.addr %s296, 256
        %s298 = scalar_lea.vmem [#allocation8], %s297
        // Predicated region
        $region49: #{tpu_custom_call.1} parent=39 // pred_check
          %p299 = pneg %p110
        $region50: #{tpu_custom_call.1} parent=39 // pred_check_branch
          %301 = sbr.rel (%p299) target = $region52
        $region51: #{tpu_custom_call.1} parent=39 // pred_region
          %302 = dma.done %s295, 4096
        $region52: #{tpu_custom_call.1} parent=39 // pred_fallthru
          _
        // Predicated region
        $region53: #{tpu_custom_call.1} parent=39 // pred_check
          %p303 = pneg %p131
        $region54: #{tpu_custom_call.1} parent=39 // pred_check_branch
          %305 = sbr.rel (%p303) target = $region56
        $region55: #{tpu_custom_call.1} parent=39 // pred_region
          %306 = dma.done [#allocation7], 2048
        $region56: #{tpu_custom_call.1} parent=39 // pred_fallthru
          _
        %s307 = sand.u32 %s23, 1
        %s308 = scalar_lea.sflag [#allocation4], %s307
        %s309 = sand.u32 %s45, 1
        %s310 = smul.addr %s309, 512
        %s311 = scalar_lea.vmem [#allocation3], %s310
        %p312 = pneg %p58
        %p313 = pneg %p55
        %p314 = pneg %p84
        %p315 = pneg %p81
        %s316 = sand.u32 %s23, 1
        %s317 = scalar_lea.sflag [#allocation4], %s316
        %s318 = sand.u32 %s97, 1
        %s319 = smul.addr %s318, 256
        %s320 = scalar_lea.vmem [#allocation8], %s319
        %p321 = pneg %p110
        %p322 = pneg %p107
        %p323 = pneg %p131
        %p324 = pneg %p128
        %p325 = pneg %p152
        %p326 = pneg %p149
        %p327 = pneg %p178
        %p328 = pneg %p175
        %s329 = sand.u32 %s165, 1
        %s330 = scalar_lea.sflag [#allocation5], %s329
        %s331 = sand.u32 %s165, 1
        %s332 = smul.addr %s331, 256
        %s333 = scalar_lea.vmem [#allocation10], %s332
        %s334 = smul.u32 32, %s27
        %s335 = smul.u32 4, %s28
        %s336 = smul.u32 64, %s28
        %s337 = smul.u32 32, %s27
        %s338 = smul.u32 32, %s27
        %p339 = scmp.eq.s32.totalorder %s28, 0
        // Predicated region
        $region57: #{tpu_custom_call.1} parent=39 // pred_check
          %p340 = pneg %p339
        $region58: #{tpu_custom_call.1} parent=39 // pred_check_branch
          %342 = sbr.rel (%p340) target = $region60
        $region59: #{tpu_custom_call.1} parent=39 // pred_region
          %343 = vst [vmem:[#allocation2] sm:$0xff] 0.0
          %344 = vst [vmem:[#allocation2 + $0x8] sm:$0xff] 0.0
          %345 = vst [vmem:[#allocation2 + $0x10] sm:$0xff] 0.0
          %346 = vst [vmem:[#allocation2 + $0x18] sm:$0xff] 0.0
          %347 = vst [vmem:[#allocation2 + $0x20] sm:$0xff] 0.0
          %348 = vst [vmem:[#allocation2 + $0x28] sm:$0xff] 0.0
          %349 = vst [vmem:[#allocation2 + $0x30] sm:$0xff] 0.0
          %350 = vst [vmem:[#allocation2 + $0x38] sm:$0xff] 0.0
          %351 = vst [vmem:[#allocation2 + $0x40] sm:$0xff] 0.0
          %352 = vst [vmem:[#allocation2 + $0x48] sm:$0xff] 0.0
          %353 = vst [vmem:[#allocation2 + $0x50] sm:$0xff] 0.0
          %354 = vst [vmem:[#allocation2 + $0x58] sm:$0xff] 0.0
          %355 = vst [vmem:[#allocation2 + $0x60] sm:$0xff] 0.0
          %356 = vst [vmem:[#allocation2 + $0x68] sm:$0xff] 0.0
          %357 = vst [vmem:[#allocation2 + $0x70] sm:$0xff] 0.0
          %358 = vst [vmem:[#allocation2 + $0x78] sm:$0xff] 0.0
          %359 = vst [vmem:[#allocation2 + $0x80] sm:$0xff] 0.0
          %360 = vst [vmem:[#allocation2 + $0x88] sm:$0xff] 0.0
          %361 = vst [vmem:[#allocation2 + $0x90] sm:$0xff] 0.0
          %362 = vst [vmem:[#allocation2 + $0x98] sm:$0xff] 0.0
          %363 = vst [vmem:[#allocation2 + $0xa0] sm:$0xff] 0.0
          %364 = vst [vmem:[#allocation2 + $0xa8] sm:$0xff] 0.0
          %365 = vst [vmem:[#allocation2 + $0xb0] sm:$0xff] 0.0
          %366 = vst [vmem:[#allocation2 + $0xb8] sm:$0xff] 0.0
          %367 = vst [vmem:[#allocation2 + $0xc0] sm:$0xff] 0.0
          %368 = vst [vmem:[#allocation2 + $0xc8] sm:$0xff] 0.0
          %369 = vst [vmem:[#allocation2 + $0xd0] sm:$0xff] 0.0
          %370 = vst [vmem:[#allocation2 + $0xd8] sm:$0xff] 0.0
          %371 = vst [vmem:[#allocation2 + $0xe0] sm:$0xff] 0.0
          %372 = vst [vmem:[#allocation2 + $0xe8] sm:$0xff] 0.0
          %373 = vst [vmem:[#allocation2 + $0xf0] sm:$0xff] 0.0
          %374 = vst [vmem:[#allocation2 + $0xf8] sm:$0xff] 0.0
        $region60: #{tpu_custom_call.1} parent=39 // pred_fallthru
          _
        %v375 = vld [vmem:[#allocation2] sm:$0xff]
        %v376 = vld [vmem:[#allocation2 + $0x8] sm:$0xff]
        %v377 = vld [vmem:[#allocation2 + $0x10] sm:$0xff]
        %v378 = vld [vmem:[#allocation2 + $0x18] sm:$0xff]
        %v379 = vld [vmem:[#allocation2 + $0x20] sm:$0xff]
        %v380 = vld [vmem:[#allocation2 + $0x28] sm:$0xff]
        %v381 = vld [vmem:[#allocation2 + $0x30] sm:$0xff]
        %v382 = vld [vmem:[#allocation2 + $0x38] sm:$0xff]
        %v383 = vld [vmem:[#allocation2 + $0x40] sm:$0xff]
        %v384 = vld [vmem:[#allocation2 + $0x48] sm:$0xff]
        %v385 = vld [vmem:[#allocation2 + $0x50] sm:$0xff]
        %v386 = vld [vmem:[#allocation2 + $0x58] sm:$0xff]
        %v387 = vld [vmem:[#allocation2 + $0x60] sm:$0xff]
        %v388 = vld [vmem:[#allocation2 + $0x68] sm:$0xff]
        %v389 = vld [vmem:[#allocation2 + $0x70] sm:$0xff]
        %v390 = vld [vmem:[#allocation2 + $0x78] sm:$0xff]
        %v391 = vld [vmem:[#allocation2 + $0x80] sm:$0xff]
        %v392 = vld [vmem:[#allocation2 + $0x88] sm:$0xff]
        %v393 = vld [vmem:[#allocation2 + $0x90] sm:$0xff]
        %v394 = vld [vmem:[#allocation2 + $0x98] sm:$0xff]
        %v395 = vld [vmem:[#allocation2 + $0xa0] sm:$0xff]
        %v396 = vld [vmem:[#allocation2 + $0xa8] sm:$0xff]
        %v397 = vld [vmem:[#allocation2 + $0xb0] sm:$0xff]
        %v398 = vld [vmem:[#allocation2 + $0xb8] sm:$0xff]
        %v399 = vld [vmem:[#allocation2 + $0xc0] sm:$0xff]
        %v400 = vld [vmem:[#allocation2 + $0xc8] sm:$0xff]
        %v401 = vld [vmem:[#allocation2 + $0xd0] sm:$0xff]
        %v402 = vld [vmem:[#allocation2 + $0xd8] sm:$0xff]
        %v403 = vld [vmem:[#allocation2 + $0xe0] sm:$0xff]
        %v404 = vld [vmem:[#allocation2 + $0xe8] sm:$0xff]
        %v405 = vld [vmem:[#allocation2 + $0xf0] sm:$0xff]
        %v406 = vld [vmem:[#allocation2 + $0xf8] sm:$0xff]
        %v407 = vld [vmem:[%s285] sm:$0xff]
        %v408 = vld [vmem:[%s285 + $0x8] sm:$0xff]
        %v409 = vld [vmem:[%s285 + $0x10] sm:$0xff]
        %v410 = vld [vmem:[%s285 + $0x18] sm:$0xff]
        %v411 = vld [vmem:[%s285 + $0x20] sm:$0xff]
        %v412 = vld [vmem:[%s285 + $0x28] sm:$0xff]
        %v413 = vld [vmem:[%s285 + $0x30] sm:$0xff]
        %v414 = vld [vmem:[%s285 + $0x38] sm:$0xff]
        %v415 = vld [vmem:[%s285 + $0x40] sm:$0xff]
        %v416 = vld [vmem:[%s285 + $0x48] sm:$0xff]
        %v417 = vld [vmem:[%s285 + $0x50] sm:$0xff]
        %v418 = vld [vmem:[%s285 + $0x58] sm:$0xff]
        %v419 = vld [vmem:[%s285 + $0x60] sm:$0xff]
        %v420 = vld [vmem:[%s285 + $0x68] sm:$0xff]
        %v421 = vld [vmem:[%s285 + $0x70] sm:$0xff]
        %v422 = vld [vmem:[%s285 + $0x78] sm:$0xff]
        %v423 = vld [vmem:[%s285 + $0x80] sm:$0xff]
        %v424 = vld [vmem:[%s285 + $0x88] sm:$0xff]
        %v425 = vld [vmem:[%s285 + $0x90] sm:$0xff]
        %v426 = vld [vmem:[%s285 + $0x98] sm:$0xff]
        %v427 = vld [vmem:[%s285 + $0xa0] sm:$0xff]
        %v428 = vld [vmem:[%s285 + $0xa8] sm:$0xff]
        %v429 = vld [vmem:[%s285 + $0xb0] sm:$0xff]
        %v430 = vld [vmem:[%s285 + $0xb8] sm:$0xff]
        %v431 = vld [vmem:[%s285 + $0xc0] sm:$0xff]
        %v432 = vld [vmem:[%s285 + $0xc8] sm:$0xff]
        %v433 = vld [vmem:[%s285 + $0xd0] sm:$0xff]
        %v434 = vld [vmem:[%s285 + $0xd8] sm:$0xff]
        %v435 = vld [vmem:[%s285 + $0xe0] sm:$0xff]
        %v436 = vld [vmem:[%s285 + $0xe8] sm:$0xff]
        %v437 = vld [vmem:[%s285 + $0xf0] sm:$0xff]
        %v438 = vld [vmem:[%s285 + $0xf8] sm:$0xff]
        %v439 = vld [vmem:[%s285 + $0x100] sm:$0xff]
        %v440 = vld [vmem:[%s285 + $0x108] sm:$0xff]
        %v441 = vld [vmem:[%s285 + $0x110] sm:$0xff]
        %v442 = vld [vmem:[%s285 + $0x118] sm:$0xff]
        %v443 = vld [vmem:[%s285 + $0x120] sm:$0xff]
        %v444 = vld [vmem:[%s285 + $0x128] sm:$0xff]
        %v445 = vld [vmem:[%s285 + $0x130] sm:$0xff]
        %v446 = vld [vmem:[%s285 + $0x138] sm:$0xff]
        %v447 = vld [vmem:[%s285 + $0x140] sm:$0xff]
        %v448 = vld [vmem:[%s285 + $0x148] sm:$0xff]
        %v449 = vld [vmem:[%s285 + $0x150] sm:$0xff]
        %v450 = vld [vmem:[%s285 + $0x158] sm:$0xff]
        %v451 = vld [vmem:[%s285 + $0x160] sm:$0xff]
        %v452 = vld [vmem:[%s285 + $0x168] sm:$0xff]
        %v453 = vld [vmem:[%s285 + $0x170] sm:$0xff]
        %v454 = vld [vmem:[%s285 + $0x178] sm:$0xff]
        %v455 = vld [vmem:[%s285 + $0x180] sm:$0xff]
        %v456 = vld [vmem:[%s285 + $0x188] sm:$0xff]
        %v457 = vld [vmem:[%s285 + $0x190] sm:$0xff]
        %v458 = vld [vmem:[%s285 + $0x198] sm:$0xff]
        %v459 = vld [vmem:[%s285 + $0x1a0] sm:$0xff]
        %v460 = vld [vmem:[%s285 + $0x1a8] sm:$0xff]
        %v461 = vld [vmem:[%s285 + $0x1b0] sm:$0xff]
        %v462 = vld [vmem:[%s285 + $0x1b8] sm:$0xff]
        %v463 = vld [vmem:[%s285 + $0x1c0] sm:$0xff]
        %v464 = vld [vmem:[%s285 + $0x1c8] sm:$0xff]
        %v465 = vld [vmem:[%s285 + $0x1d0] sm:$0xff]
        %v466 = vld [vmem:[%s285 + $0x1d8] sm:$0xff]
        %v467 = vld [vmem:[%s285 + $0x1e0] sm:$0xff]
        %v468 = vld [vmem:[%s285 + $0x1e8] sm:$0xff]
        %v469 = vld [vmem:[%s285 + $0x1f0] sm:$0xff]
        %v470 = vld [vmem:[%s285 + $0x1f8] sm:$0xff]
        %v471 = vld [vmem:[#allocation6] sm:$0xff]
        %v472 = vld [vmem:[#allocation6 + $0x8] sm:$0xff]
        %v473 = vld [vmem:[#allocation6 + $0x10] sm:$0xff]
        %v474 = vld [vmem:[#allocation6 + $0x18] sm:$0xff]
        %v475 = vld [vmem:[#allocation6 + $0x20] sm:$0xff]
        %v476 = vld [vmem:[#allocation6 + $0x28] sm:$0xff]
        %v477 = vld [vmem:[#allocation6 + $0x30] sm:$0xff]
        %v478 = vld [vmem:[#allocation6 + $0x38] sm:$0xff]
        %v479 = vld [vmem:[#allocation6 + $0x40] sm:$0xff]
        %v480 = vld [vmem:[#allocation6 + $0x48] sm:$0xff]
        %v481 = vld [vmem:[#allocation6 + $0x50] sm:$0xff]
        %v482 = vld [vmem:[#allocation6 + $0x58] sm:$0xff]
        %v483 = vld [vmem:[#allocation6 + $0x60] sm:$0xff]
        %v484 = vld [vmem:[#allocation6 + $0x68] sm:$0xff]
        %v485 = vld [vmem:[#allocation6 + $0x70] sm:$0xff]
        %v486 = vld [vmem:[#allocation6 + $0x78] sm:$0xff]
        %v487 = vld [vmem:[#allocation6 + $0x80] sm:$0xff]
        %v488 = vld [vmem:[#allocation6 + $0x88] sm:$0xff]
        %v489 = vld [vmem:[#allocation6 + $0x90] sm:$0xff]
        %v490 = vld [vmem:[#allocation6 + $0x98] sm:$0xff]
        %v491 = vld [vmem:[#allocation6 + $0xa0] sm:$0xff]
        %v492 = vld [vmem:[#allocation6 + $0xa8] sm:$0xff]
        %v493 = vld [vmem:[#allocation6 + $0xb0] sm:$0xff]
        %v494 = vld [vmem:[#allocation6 + $0xb8] sm:$0xff]
        %v495 = vld [vmem:[#allocation6 + $0xc0] sm:$0xff]
        %v496 = vld [vmem:[#allocation6 + $0xc8] sm:$0xff]
        %v497 = vld [vmem:[#allocation6 + $0xd0] sm:$0xff]
        %v498 = vld [vmem:[#allocation6 + $0xd8] sm:$0xff]
        %v499 = vld [vmem:[#allocation6 + $0xe0] sm:$0xff]
        %v500 = vld [vmem:[#allocation6 + $0xe8] sm:$0xff]
        %v501 = vld [vmem:[#allocation6 + $0xf0] sm:$0xff]
        %v502 = vld [vmem:[#allocation6 + $0xf8] sm:$0xff]
        %v503 = vld [vmem:[#allocation6 + $0x100] sm:$0xff]
        %v504 = vld [vmem:[#allocation6 + $0x108] sm:$0xff]
        %v505 = vld [vmem:[#allocation6 + $0x110] sm:$0xff]
        %v506 = vld [vmem:[#allocation6 + $0x118] sm:$0xff]
        %v507 = vld [vmem:[#allocation6 + $0x120] sm:$0xff]
        %v508 = vld [vmem:[#allocation6 + $0x128] sm:$0xff]
        %v509 = vld [vmem:[#allocation6 + $0x130] sm:$0xff]
        %v510 = vld [vmem:[#allocation6 + $0x138] sm:$0xff]
        %v511 = vld [vmem:[#allocation6 + $0x140] sm:$0xff]
        %v512 = vld [vmem:[#allocation6 + $0x148] sm:$0xff]
        %v513 = vld [vmem:[#allocation6 + $0x150] sm:$0xff]
        %v514 = vld [vmem:[#allocation6 + $0x158] sm:$0xff]
        %v515 = vld [vmem:[#allocation6 + $0x160] sm:$0xff]
        %v516 = vld [vmem:[#allocation6 + $0x168] sm:$0xff]
        %v517 = vld [vmem:[#allocation6 + $0x170] sm:$0xff]
        %v518 = vld [vmem:[#allocation6 + $0x178] sm:$0xff]
        %v519 = vld [vmem:[#allocation6 + $0x180] sm:$0xff]
        %v520 = vld [vmem:[#allocation6 + $0x188] sm:$0xff]
        %v521 = vld [vmem:[#allocation6 + $0x190] sm:$0xff]
        %v522 = vld [vmem:[#allocation6 + $0x198] sm:$0xff]
        %v523 = vld [vmem:[#allocation6 + $0x1a0] sm:$0xff]
        %v524 = vld [vmem:[#allocation6 + $0x1a8] sm:$0xff]
        %v525 = vld [vmem:[#allocation6 + $0x1b0] sm:$0xff]
        %v526 = vld [vmem:[#allocation6 + $0x1b8] sm:$0xff]
        %v527 = vld [vmem:[#allocation6 + $0x1c0] sm:$0xff]
        %v528 = vld [vmem:[#allocation6 + $0x1c8] sm:$0xff]
        %v529 = vld [vmem:[#allocation6 + $0x1d0] sm:$0xff]
        %v530 = vld [vmem:[#allocation6 + $0x1d8] sm:$0xff]
        %v531 = vld [vmem:[#allocation6 + $0x1e0] sm:$0xff]
        %v532 = vld [vmem:[#allocation6 + $0x1e8] sm:$0xff]
        %v533 = vld [vmem:[#allocation6 + $0x1f0] sm:$0xff]
        %v534 = vld [vmem:[#allocation6 + $0x1f8] sm:$0xff]
        %v599 = vunpack.c.l.b16 %v407
        %v600 = vunpack.c.h.b16 %v407
        %v601 = vunpack.c.l.b16 %v408
        %v602 = vunpack.c.h.b16 %v408
        %v603 = vunpack.c.l.b16 %v409
        %v604 = vunpack.c.h.b16 %v409
        %v605 = vunpack.c.l.b16 %v410
        %v606 = vunpack.c.h.b16 %v410
        %v607 = vunpack.c.l.b16 %v411
        %v608 = vunpack.c.h.b16 %v411
        %v609 = vunpack.c.l.b16 %v412
        %v610 = vunpack.c.h.b16 %v412
        %v611 = vunpack.c.l.b16 %v413
        %v612 = vunpack.c.h.b16 %v413
        %v613 = vunpack.c.l.b16 %v414
        %v614 = vunpack.c.h.b16 %v414
        %v615 = vunpack.c.l.b16 %v415
        %v616 = vunpack.c.h.b16 %v415
        %v617 = vunpack.c.l.b16 %v416
        %v618 = vunpack.c.h.b16 %v416
        %v619 = vunpack.c.l.b16 %v417
        %v620 = vunpack.c.h.b16 %v417
        %v621 = vunpack.c.l.b16 %v418
        %v622 = vunpack.c.h.b16 %v418
        %v623 = vunpack.c.l.b16 %v419
        %v624 = vunpack.c.h.b16 %v419
        %v625 = vunpack.c.l.b16 %v420
        %v626 = vunpack.c.h.b16 %v420
        %v627 = vunpack.c.l.b16 %v421
        %v628 = vunpack.c.h.b16 %v421
        %v629 = vunpack.c.l.b16 %v422
        %v630 = vunpack.c.h.b16 %v422
        %v631 = vunpack.c.l.b16 %v423
        %v632 = vunpack.c.h.b16 %v423
        %v633 = vunpack.c.l.b16 %v424
        %v634 = vunpack.c.h.b16 %v424
        %v635 = vunpack.c.l.b16 %v425
        %v636 = vunpack.c.h.b16 %v425
        %v637 = vunpack.c.l.b16 %v426
        %v638 = vunpack.c.h.b16 %v426
        %v639 = vunpack.c.l.b16 %v427
        %v640 = vunpack.c.h.b16 %v427
        %v641 = vunpack.c.l.b16 %v428
        %v642 = vunpack.c.h.b16 %v428
        %v643 = vunpack.c.l.b16 %v429
        %v644 = vunpack.c.h.b16 %v429
        %v645 = vunpack.c.l.b16 %v430
        %v646 = vunpack.c.h.b16 %v430
        %v647 = vunpack.c.l.b16 %v431
        %v648 = vunpack.c.h.b16 %v431
        %v649 = vunpack.c.l.b16 %v432
        %v650 = vunpack.c.h.b16 %v432
        %v651 = vunpack.c.l.b16 %v433
        %v652 = vunpack.c.h.b16 %v433
        %v653 = vunpack.c.l.b16 %v434
        %v654 = vunpack.c.h.b16 %v434
        %v655 = vunpack.c.l.b16 %v435
        %v656 = vunpack.c.h.b16 %v435
        %v657 = vunpack.c.l.b16 %v436
        %v658 = vunpack.c.h.b16 %v436
        %v659 = vunpack.c.l.b16 %v437
        %v660 = vunpack.c.h.b16 %v437
        %v661 = vunpack.c.l.b16 %v438
        %v662 = vunpack.c.h.b16 %v438
        %v663 = vunpack.c.l.b16 %v439
        %v664 = vunpack.c.h.b16 %v439
        %v665 = vunpack.c.l.b16 %v440
        %v666 = vunpack.c.h.b16 %v440
        %v667 = vunpack.c.l.b16 %v441
        %v668 = vunpack.c.h.b16 %v441
        %v669 = vunpack.c.l.b16 %v442
        %v670 = vunpack.c.h.b16 %v442
        %v671 = vunpack.c.l.b16 %v443
        %v672 = vunpack.c.h.b16 %v443
        %v673 = vunpack.c.l.b16 %v444
        %v674 = vunpack.c.h.b16 %v444
        %v675 = vunpack.c.l.b16 %v445
        %v676 = vunpack.c.h.b16 %v445
        %v677 = vunpack.c.l.b16 %v446
        %v678 = vunpack.c.h.b16 %v446
        %v679 = vunpack.c.l.b16 %v447
        %v680 = vunpack.c.h.b16 %v447
        %v681 = vunpack.c.l.b16 %v448
        %v682 = vunpack.c.h.b16 %v448
        %v683 = vunpack.c.l.b16 %v449
        %v684 = vunpack.c.h.b16 %v449
        %v685 = vunpack.c.l.b16 %v450
        %v686 = vunpack.c.h.b16 %v450
        %v687 = vunpack.c.l.b16 %v451
        %v688 = vunpack.c.h.b16 %v451
        %v689 = vunpack.c.l.b16 %v452
        %v690 = vunpack.c.h.b16 %v452
        %v691 = vunpack.c.l.b16 %v453
        %v692 = vunpack.c.h.b16 %v453
        %v693 = vunpack.c.l.b16 %v454
        %v694 = vunpack.c.h.b16 %v454
        %v695 = vunpack.c.l.b16 %v455
        %v696 = vunpack.c.h.b16 %v455
        %v697 = vunpack.c.l.b16 %v456
        %v698 = vunpack.c.h.b16 %v456
        %v699 = vunpack.c.l.b16 %v457
        %v700 = vunpack.c.h.b16 %v457
        %v701 = vunpack.c.l.b16 %v458
        %v702 = vunpack.c.h.b16 %v458
        %v703 = vunpack.c.l.b16 %v459
        %v704 = vunpack.c.h.b16 %v459
        %v705 = vunpack.c.l.b16 %v460
        %v706 = vunpack.c.h.b16 %v460
        %v707 = vunpack.c.l.b16 %v461
        %v708 = vunpack.c.h.b16 %v461
        %v709 = vunpack.c.l.b16 %v462
        %v710 = vunpack.c.h.b16 %v462
        %v711 = vunpack.c.l.b16 %v463
        %v712 = vunpack.c.h.b16 %v463
        %v713 = vunpack.c.l.b16 %v464
        %v714 = vunpack.c.h.b16 %v464
        %v715 = vunpack.c.l.b16 %v465
        %v716 = vunpack.c.h.b16 %v465
        %v717 = vunpack.c.l.b16 %v466
        %v718 = vunpack.c.h.b16 %v466
        %v719 = vunpack.c.l.b16 %v467
        %v720 = vunpack.c.h.b16 %v467
        %v721 = vunpack.c.l.b16 %v468
        %v722 = vunpack.c.h.b16 %v468
        %v723 = vunpack.c.l.b16 %v469
        %v724 = vunpack.c.h.b16 %v469
        %v725 = vunpack.c.l.b16 %v470
        %v726 = vunpack.c.h.b16 %v470
        %v727 = vpack.c.b16 %v603, %v599
        %v728 = vpack.c.b16 %v604, %v600
        %v729 = vpack.c.b16 %v605, %v601
        %v730 = vpack.c.b16 %v606, %v602
        %v731 = vpack.c.b16 %v611, %v607
        %v732 = vpack.c.b16 %v612, %v608
        %v733 = vpack.c.b16 %v613, %v609
        %v734 = vpack.c.b16 %v614, %v610
        %v735 = vpack.c.b16 %v619, %v615
        %v736 = vpack.c.b16 %v620, %v616
        %v737 = vpack.c.b16 %v621, %v617
        %v738 = vpack.c.b16 %v622, %v618
        %v739 = vpack.c.b16 %v627, %v623
        %v740 = vpack.c.b16 %v628, %v624
        %v741 = vpack.c.b16 %v629, %v625
        %v742 = vpack.c.b16 %v630, %v626
        %v743 = vpack.c.b16 %v635, %v631
        %v744 = vpack.c.b16 %v636, %v632
        %v745 = vpack.c.b16 %v637, %v633
        %v746 = vpack.c.b16 %v638, %v634
        %v747 = vpack.c.b16 %v643, %v639
        %v748 = vpack.c.b16 %v644, %v640
        %v749 = vpack.c.b16 %v645, %v641
        %v750 = vpack.c.b16 %v646, %v642
        %v751 = vpack.c.b16 %v651, %v647
        %v752 = vpack.c.b16 %v652, %v648
        %v753 = vpack.c.b16 %v653, %v649
        %v754 = vpack.c.b16 %v654, %v650
        %v755 = vpack.c.b16 %v659, %v655
        %v756 = vpack.c.b16 %v660, %v656
        %v757 = vpack.c.b16 %v661, %v657
        %v758 = vpack.c.b16 %v662, %v658
        %v759 = vpack.c.b16 %v667, %v663
        %v760 = vpack.c.b16 %v668, %v664
        %v761 = vpack.c.b16 %v669, %v665
        %v762 = vpack.c.b16 %v670, %v666
        %v763 = vpack.c.b16 %v675, %v671
        %v764 = vpack.c.b16 %v676, %v672
        %v765 = vpack.c.b16 %v677, %v673
        %v766 = vpack.c.b16 %v678, %v674
        %v767 = vpack.c.b16 %v683, %v679
        %v768 = vpack.c.b16 %v684, %v680
        %v769 = vpack.c.b16 %v685, %v681
        %v770 = vpack.c.b16 %v686, %v682
        %v771 = vpack.c.b16 %v691, %v687
        %v772 = vpack.c.b16 %v692, %v688
        %v773 = vpack.c.b16 %v693, %v689
        %v774 = vpack.c.b16 %v694, %v690
        %v775 = vpack.c.b16 %v699, %v695
        %v776 = vpack.c.b16 %v700, %v696
        %v777 = vpack.c.b16 %v701, %v697
        %v778 = vpack.c.b16 %v702, %v698
        %v779 = vpack.c.b16 %v707, %v703
        %v780 = vpack.c.b16 %v708, %v704
        %v781 = vpack.c.b16 %v709, %v705
        %v782 = vpack.c.b16 %v710, %v706
        %v783 = vpack.c.b16 %v715, %v711
        %v784 = vpack.c.b16 %v716, %v712
        %v785 = vpack.c.b16 %v717, %v713
        %v786 = vpack.c.b16 %v718, %v714
        %v787 = vpack.c.b16 %v723, %v719
        %v788 = vpack.c.b16 %v724, %v720
        %v789 = vpack.c.b16 %v725, %v721
        %v790 = vpack.c.b16 %v726, %v722
        %855 = vmatprep.subr.mxu0 0.0
        %856 = vmatpush1.msra.mxu0 %v471
        %857 = vmatprep.subr.mxu0 0.0
        %858 = vmatpush1.msra.mxu0 %v472
        %859 = vmatprep.subr.mxu0 0.0
        %860 = vmatpush1.msra.mxu0 %v473
        %861 = vmatprep.subr.mxu0 0.0
        %862 = vmatpush1.msra.mxu0 %v474
        %863 = vmatprep.subr.mxu0 0.0
        %864 = vmatpush1.msra.mxu0 %v475
        %865 = vmatprep.subr.mxu0 0.0
        %866 = vmatpush1.msra.mxu0 %v476
        %867 = vmatprep.subr.mxu0 0.0
        %868 = vmatpush1.msra.mxu0 %v477
        %869 = vmatprep.subr.mxu0 0.0
        %870 = vmatpush1.msra.mxu0 %v478
        %871 = vmatprep.subr.mxu0 0.0
        %872 = vmatpush1.msra.mxu0 %v479
        %873 = vmatprep.subr.mxu0 0.0
        %874 = vmatpush1.msra.mxu0 %v480
        %875 = vmatprep.subr.mxu0 0.0
        %876 = vmatpush1.msra.mxu0 %v481
        %877 = vmatprep.subr.mxu0 0.0
        %878 = vmatpush1.msra.mxu0 %v482
        %879 = vmatprep.subr.mxu0 0.0
        %880 = vmatpush1.msra.mxu0 %v483
        %881 = vmatprep.subr.mxu0 0.0
        %882 = vmatpush1.msra.mxu0 %v484
        %883 = vmatprep.subr.mxu0 0.0
        %884 = vmatpush1.msra.mxu0 %v485
        %885 = vmatprep.subr.mxu0 0.0
        %886 = vmatpush1.msra.mxu0 %v486
        %887 = vmatprep.subr.mxu0 0.0
        %888 = vmatpush1.msra.mxu0 %v487
        %889 = vmatprep.subr.mxu0 0.0
        %890 = vmatpush1.msra.mxu0 %v488
        %891 = vmatprep.subr.mxu0 0.0
        %892 = vmatpush1.msra.mxu0 %v489
        %893 = vmatprep.subr.mxu0 0.0
        %894 = vmatpush1.msra.mxu0 %v490
        %895 = vmatprep.subr.mxu0 0.0
        %896 = vmatpush1.msra.mxu0 %v491
        %897 = vmatprep.subr.mxu0 0.0
        %898 = vmatpush1.msra.mxu0 %v492
        %899 = vmatprep.subr.mxu0 0.0
        %900 = vmatpush1.msra.mxu0 %v493
        %901 = vmatprep.subr.mxu0 0.0
        %902 = vmatpush1.msra.mxu0 %v494
        %903 = vmatprep.subr.mxu0 0.0
        %904 = vmatpush1.msra.mxu0 %v495
        %905 = vmatprep.subr.mxu0 0.0
        %906 = vmatpush1.msra.mxu0 %v496
        %907 = vmatprep.subr.mxu0 0.0
        %908 = vmatpush1.msra.mxu0 %v497
        %909 = vmatprep.subr.mxu0 0.0
        %910 = vmatpush1.msra.mxu0 %v498
        %911 = vmatprep.subr.mxu0 0.0
        %912 = vmatpush1.msra.mxu0 %v499
        %913 = vmatprep.subr.mxu0 0.0
        %914 = vmatpush1.msra.mxu0 %v500
        %915 = vmatprep.subr.mxu0 0.0
        %916 = vmatpush1.msra.mxu0 %v501
        %917 = vmatprep.subr.mxu0 0.0
        %918 = vmatpush1.msra.mxu0 %v502
        %919 = vmatprep.mubr.bf16.mxu0 %v728
        %920 = vmatmul.mubr.bf16.gmra.mrb[0].mxu0 %v727
        %v921 = vpop.f32.mrb[0].mxu0
        %v922 = vadd.f32 0.0, %v921
        %v923 = vpop.f32.mrb[0].mxu0
        %v924 = vpop.f32.mrb[0].mxu0
        %v925 = vadd.f32 0.0, %v924
        %v926 = vpop.f32.mrb[0].mxu0
        %927 = vmatprep.mubr.bf16.mxu0 %v732
        %928 = vmatmul.mubr.bf16.gmra.mrb[0].mxu0 %v731
        %v929 = vpop.f32.mrb[0].mxu0
        %v930 = vadd.f32 0.0, %v929
        %v931 = vpop.f32.mrb[0].mxu0
        %v932 = vpop.f32.mrb[0].mxu0
        %v933 = vadd.f32 0.0, %v932
        %v934 = vpop.f32.mrb[0].mxu0
        %935 = vmatprep.mubr.bf16.mxu0 %v736
        %936 = vmatmul.mubr.bf16.gmra.mrb[0].mxu0 %v735
        %v937 = vpop.f32.mrb[0].mxu0
        %v938 = vadd.f32 0.0, %v937
        %v939 = vpop.f32.mrb[0].mxu0
        %v940 = vpop.f32.mrb[0].mxu0
        %v941 = vadd.f32 0.0, %v940
        %v942 = vpop.f32.mrb[0].mxu0
        %943 = vmatprep.mubr.bf16.mxu0 %v740
        %944 = vmatmul.mubr.bf16.gmra.mrb[0].mxu0 %v739
        %v945 = vpop.f32.mrb[0].mxu0
        %v946 = vadd.f32 0.0, %v945
        %v947 = vpop.f32.mrb[0].mxu0
        %v948 = vpop.f32.mrb[0].mxu0
        %v949 = vadd.f32 0.0, %v948
        %v950 = vpop.f32.mrb[0].mxu0
        %951 = vmatprep.mubr.bf16.mxu0 %v744
        %952 = vmatmul.mubr.bf16.gmra.mrb[0].mxu0 %v743
        %v953 = vpop.f32.mrb[0].mxu0
        %v954 = vadd.f32 0.0, %v953
        %v955 = vpop.f32.mrb[0].mxu0
        %v956 = vpop.f32.mrb[0].mxu0
        %v957 = vadd.f32 0.0, %v956
        %v958 = vpop.f32.mrb[0].mxu0
        %959 = vmatprep.mubr.bf16.mxu0 %v748
        %960 = vmatmul.mubr.bf16.gmra.mrb[0].mxu0 %v747
        %v961 = vpop.f32.mrb[0].mxu0
        %v962 = vadd.f32 0.0, %v961
        %v963 = vpop.f32.mrb[0].mxu0
        %v964 = vpop.f32.mrb[0].mxu0
        %v965 = vadd.f32 0.0, %v964
        %v966 = vpop.f32.mrb[0].mxu0
        %967 = vmatprep.mubr.bf16.mxu0 %v752
        %968 = vmatmul.mubr.bf16.gmra.mrb[0].mxu0 %v751
        %v969 = vpop.f32.mrb[0].mxu0
        %v970 = vadd.f32 0.0, %v969
        %v971 = vpop.f32.mrb[0].mxu0
        %v972 = vpop.f32.mrb[0].mxu0
        %v973 = vadd.f32 0.0, %v972
        %v974 = vpop.f32.mrb[0].mxu0
        %975 = vmatprep.mubr.bf16.mxu0 %v756
        %976 = vmatmul.mubr.bf16.gmra.mrb[0].mxu0 %v755
        %v977 = vpop.f32.mrb[0].mxu0
        %v978 = vadd.f32 0.0, %v977
        %v979 = vpop.f32.mrb[0].mxu0
        %v980 = vpop.f32.mrb[0].mxu0
        %v981 = vadd.f32 0.0, %v980
        %v982 = vpop.f32.mrb[0].mxu0
        %983 = vmatprep.mubr.bf16.mxu0 %v760
        %984 = vmatmul.mubr.bf16.gmra.mrb[0].mxu0 %v759
        %v985 = vpop.f32.mrb[0].mxu0
        %v986 = vadd.f32 0.0, %v985
        %v987 = vpop.f32.mrb[0].mxu0
        %v988 = vpop.f32.mrb[0].mxu0
        %v989 = vadd.f32 0.0, %v988
        %v990 = vpop.f32.mrb[0].mxu0
        %991 = vmatprep.mubr.bf16.mxu0 %v764
        %992 = vmatmul.mubr.bf16.gmra.mrb[0].mxu0 %v763
        %v993 = vpop.f32.mrb[0].mxu0
        %v994 = vadd.f32 0.0, %v993
        %v995 = vpop.f32.mrb[0].mxu0
        %v996 = vpop.f32.mrb[0].mxu0
        %v997 = vadd.f32 0.0, %v996
        %v998 = vpop.f32.mrb[0].mxu0
        %999 = vmatprep.mubr.bf16.mxu0 %v768
        %1000 = vmatmul.mubr.bf16.gmra.mrb[0].mxu0 %v767
        %v1001 = vpop.f32.mrb[0].mxu0
        %v1002 = vadd.f32 0.0, %v1001
        %v1003 = vpop.f32.mrb[0].mxu0
        %v1004 = vpop.f32.mrb[0].mxu0
        %v1005 = vadd.f32 0.0, %v1004
        %v1006 = vpop.f32.mrb[0].mxu0
        %1007 = vmatprep.mubr.bf16.mxu0 %v772
        %1008 = vmatmul.mubr.bf16.gmra.mrb[0].mxu0 %v771
        %v1009 = vpop.f32.mrb[0].mxu0
        %v1010 = vadd.f32 0.0, %v1009
        %v1011 = vpop.f32.mrb[0].mxu0
        %v1012 = vpop.f32.mrb[0].mxu0
        %v1013 = vadd.f32 0.0, %v1012
        %v1014 = vpop.f32.mrb[0].mxu0
        %1015 = vmatprep.mubr.bf16.mxu0 %v776
        %1016 = vmatmul.mubr.bf16.gmra.mrb[0].mxu0 %v775
        %v1017 = vpop.f32.mrb[0].mxu0
        %v1018 = vadd.f32 0.0, %v1017
        %v1019 = vpop.f32.mrb[0].mxu0
        %v1020 = vpop.f32.mrb[0].mxu0
        %v1021 = vadd.f32 0.0, %v1020
        %v1022 = vpop.f32.mrb[0].mxu0
        %1023 = vmatprep.mubr.bf16.mxu0 %v780
        %1024 = vmatmul.mubr.bf16.gmra.mrb[0].mxu0 %v779
        %v1025 = vpop.f32.mrb[0].mxu0
        %v1026 = vadd.f32 0.0, %v1025
        %v1027 = vpop.f32.mrb[0].mxu0
        %v1028 = vpop.f32.mrb[0].mxu0
        %v1029 = vadd.f32 0.0, %v1028
        %v1030 = vpop.f32.mrb[0].mxu0
        %1031 = vmatprep.mubr.bf16.mxu0 %v784
        %1032 = vmatmul.mubr.bf16.gmra.mrb[0].mxu0 %v783
        %v1033 = vpop.f32.mrb[0].mxu0
        %v1034 = vadd.f32 0.0, %v1033
        %v1035 = vpop.f32.mrb[0].mxu0
        %v1036 = vpop.f32.mrb[0].mxu0
        %v1037 = vadd.f32 0.0, %v1036
        %v1038 = vpop.f32.mrb[0].mxu0
        %1039 = vmatprep.mubr.bf16.mxu0 %v788
        %1040 = vmatmul.mubr.bf16.gmra.mrb[0].mxu0 %v787
        %v1041 = vpop.f32.mrb[0].mxu0
        %v1042 = vadd.f32 0.0, %v1041
        %v1043 = vpop.f32.mrb[0].mxu0
        %v1044 = vpop.f32.mrb[0].mxu0
        %v1045 = vadd.f32 0.0, %v1044
        %v1046 = vpop.f32.mrb[0].mxu0
        %1047 = vdwg.mxu0
        %1048 = vmatprep.subr.mxu0 0.0
        %1049 = vmatpush1.msra.mxu0 %v503
        %1050 = vmatprep.subr.mxu0 0.0
        %1051 = vmatpush1.msra.mxu0 %v504
        %1052 = vmatprep.subr.mxu0 0.0
        %1053 = vmatpush1.msra.mxu0 %v505
        %1054 = vmatprep.subr.mxu0 0.0
        %1055 = vmatpush1.msra.mxu0 %v506
        %1056 = vmatprep.subr.mxu0 0.0
        %1057 = vmatpush1.msra.mxu0 %v507
        %1058 = vmatprep.subr.mxu0 0.0
        %1059 = vmatpush1.msra.mxu0 %v508
        %1060 = vmatprep.subr.mxu0 0.0
        %1061 = vmatpush1.msra.mxu0 %v509
        %1062 = vmatprep.subr.mxu0 0.0
        %1063 = vmatpush1.msra.mxu0 %v510
        %1064 = vmatprep.subr.mxu0 0.0
        %1065 = vmatpush1.msra.mxu0 %v511
        %1066 = vmatprep.subr.mxu0 0.0
        %1067 = vmatpush1.msra.mxu0 %v512
        %1068 = vmatprep.subr.mxu0 0.0
        %1069 = vmatpush1.msra.mxu0 %v513
        %1070 = vmatprep.subr.mxu0 0.0
        %1071 = vmatpush1.msra.mxu0 %v514
        %1072 = vmatprep.subr.mxu0 0.0
        %1073 = vmatpush1.msra.mxu0 %v515
        %1074 = vmatprep.subr.mxu0 0.0
        %1075 = vmatpush1.msra.mxu0 %v516
        %1076 = vmatprep.subr.mxu0 0.0
        %1077 = vmatpush1.msra.mxu0 %v517
        %1078 = vmatprep.subr.mxu0 0.0
        %1079 = vmatpush1.msra.mxu0 %v518
        %1080 = vmatprep.subr.mxu0 0.0
        %1081 = vmatpush1.msra.mxu0 %v519
        %1082 = vmatprep.subr.mxu0 0.0
        %1083 = vmatpush1.msra.mxu0 %v520
        %1084 = vmatprep.subr.mxu0 0.0
        %1085 = vmatpush1.msra.mxu0 %v521
        %1086 = vmatprep.subr.mxu0 0.0
        %1087 = vmatpush1.msra.mxu0 %v522
        %1088 = vmatprep.subr.mxu0 0.0
        %1089 = vmatpush1.msra.mxu0 %v523
        %1090 = vmatprep.subr.mxu0 0.0
        %1091 = vmatpush1.msra.mxu0 %v524
        %1092 = vmatprep.subr.mxu0 0.0
        %1093 = vmatpush1.msra.mxu0 %v525
        %1094 = vmatprep.subr.mxu0 0.0
        %1095 = vmatpush1.msra.mxu0 %v526
        %1096 = vmatprep.subr.mxu0 0.0
        %1097 = vmatpush1.msra.mxu0 %v527
        %1098 = vmatprep.subr.mxu0 0.0
        %1099 = vmatpush1.msra.mxu0 %v528
        %1100 = vmatprep.subr.mxu0 0.0
        %1101 = vmatpush1.msra.mxu0 %v529
        %1102 = vmatprep.subr.mxu0 0.0
        %1103 = vmatpush1.msra.mxu0 %v530
        %1104 = vmatprep.subr.mxu0 0.0
        %1105 = vmatpush1.msra.mxu0 %v531
        %1106 = vmatprep.subr.mxu0 0.0
        %1107 = vmatpush1.msra.mxu0 %v532
        %1108 = vmatprep.subr.mxu0 0.0
        %1109 = vmatpush1.msra.mxu0 %v533
        %1110 = vmatprep.subr.mxu0 0.0
        %1111 = vmatpush1.msra.mxu0 %v534
        %1112 = vmatprep.mubr.bf16.mxu0 %v730
        %1113 = vmatmul.mubr.bf16.gmra.mrb[0].mxu0 %v729
        %v1114 = vpop.f32.mrb[0].mxu0
        %v1115 = vadd.f32 %v922, %v1114
        %v1116 = vpop.f32.mrb[0].mxu0
        %v1117 = vpop.f32.mrb[0].mxu0
        %v1118 = vadd.f32 %v925, %v1117
        %v1119 = vpop.f32.mrb[0].mxu0
        %1120 = vmatprep.mubr.bf16.mxu0 %v734
        %1121 = vmatmul.mubr.bf16.gmra.mrb[0].mxu0 %v733
        %v1122 = vpop.f32.mrb[0].mxu0
        %v1123 = vadd.f32 %v930, %v1122
        %v1124 = vpop.f32.mrb[0].mxu0
        %v1125 = vpop.f32.mrb[0].mxu0
        %v1126 = vadd.f32 %v933, %v1125
        %v1127 = vpop.f32.mrb[0].mxu0
        %1128 = vmatprep.mubr.bf16.mxu0 %v738
        %1129 = vmatmul.mubr.bf16.gmra.mrb[0].mxu0 %v737
        %v1130 = vpop.f32.mrb[0].mxu0
        %v1131 = vadd.f32 %v938, %v1130
        %v1132 = vpop.f32.mrb[0].mxu0
        %v1133 = vpop.f32.mrb[0].mxu0
        %v1134 = vadd.f32 %v941, %v1133
        %v1135 = vpop.f32.mrb[0].mxu0
        %1136 = vmatprep.mubr.bf16.mxu0 %v742
        %1137 = vmatmul.mubr.bf16.gmra.mrb[0].mxu0 %v741
        %v1138 = vpop.f32.mrb[0].mxu0
        %v1139 = vadd.f32 %v946, %v1138
        %v1140 = vpop.f32.mrb[0].mxu0
        %v1141 = vpop.f32.mrb[0].mxu0
        %v1142 = vadd.f32 %v949, %v1141
        %v1143 = vpop.f32.mrb[0].mxu0
        %1144 = vmatprep.mubr.bf16.mxu0 %v746
        %1145 = vmatmul.mubr.bf16.gmra.mrb[0].mxu0 %v745
        %v1146 = vpop.f32.mrb[0].mxu0
        %v1147 = vadd.f32 %v954, %v1146
        %v1148 = vpop.f32.mrb[0].mxu0
        %v1149 = vpop.f32.mrb[0].mxu0
        %v1150 = vadd.f32 %v957, %v1149
        %v1151 = vpop.f32.mrb[0].mxu0
        %1152 = vmatprep.mubr.bf16.mxu0 %v750
        %1153 = vmatmul.mubr.bf16.gmra.mrb[0].mxu0 %v749
        %v1154 = vpop.f32.mrb[0].mxu0
        %v1155 = vadd.f32 %v962, %v1154
        %v1156 = vpop.f32.mrb[0].mxu0
        %v1157 = vpop.f32.mrb[0].mxu0
        %v1158 = vadd.f32 %v965, %v1157
        %v1159 = vpop.f32.mrb[0].mxu0
        %1160 = vmatprep.mubr.bf16.mxu0 %v754
        %1161 = vmatmul.mubr.bf16.gmra.mrb[0].mxu0 %v753
        %v1162 = vpop.f32.mrb[0].mxu0
        %v1163 = vadd.f32 %v970, %v1162
        %v1164 = vpop.f32.mrb[0].mxu0
        %v1165 = vpop.f32.mrb[0].mxu0
        %v1166 = vadd.f32 %v973, %v1165
        %v1167 = vpop.f32.mrb[0].mxu0
        %1168 = vmatprep.mubr.bf16.mxu0 %v758
        %1169 = vmatmul.mubr.bf16.gmra.mrb[0].mxu0 %v757
        %v1170 = vpop.f32.mrb[0].mxu0
        %v1171 = vadd.f32 %v978, %v1170
        %v1172 = vpop.f32.mrb[0].mxu0
        %v1173 = vpop.f32.mrb[0].mxu0
        %v1174 = vadd.f32 %v981, %v1173
        %v1175 = vpop.f32.mrb[0].mxu0
        %1176 = vmatprep.mubr.bf16.mxu0 %v762
        %1177 = vmatmul.mubr.bf16.gmra.mrb[0].mxu0 %v761
        %v1178 = vpop.f32.mrb[0].mxu0
        %v1179 = vadd.f32 %v986, %v1178
        %v1180 = vpop.f32.mrb[0].mxu0
        %v1181 = vpop.f32.mrb[0].mxu0
        %v1182 = vadd.f32 %v989, %v1181
        %v1183 = vpop.f32.mrb[0].mxu0
        %1184 = vmatprep.mubr.bf16.mxu0 %v766
        %1185 = vmatmul.mubr.bf16.gmra.mrb[0].mxu0 %v765
        %v1186 = vpop.f32.mrb[0].mxu0
        %v1187 = vadd.f32 %v994, %v1186
        %v1188 = vpop.f32.mrb[0].mxu0
        %v1189 = vpop.f32.mrb[0].mxu0
        %v1190 = vadd.f32 %v997, %v1189
        %v1191 = vpop.f32.mrb[0].mxu0
        %1192 = vmatprep.mubr.bf16.mxu0 %v770
        %1193 = vmatmul.mubr.bf16.gmra.mrb[0].mxu0 %v769
        %v1194 = vpop.f32.mrb[0].mxu0
        %v1195 = vadd.f32 %v1002, %v1194
        %v1196 = vpop.f32.mrb[0].mxu0
        %v1197 = vpop.f32.mrb[0].mxu0
        %v1198 = vadd.f32 %v1005, %v1197
        %v1199 = vpop.f32.mrb[0].mxu0
        %1200 = vmatprep.mubr.bf16.mxu0 %v774
        %1201 = vmatmul.mubr.bf16.gmra.mrb[0].mxu0 %v773
        %v1202 = vpop.f32.mrb[0].mxu0
        %v1203 = vadd.f32 %v1010, %v1202
        %v1204 = vpop.f32.mrb[0].mxu0
        %v1205 = vpop.f32.mrb[0].mxu0
        %v1206 = vadd.f32 %v1013, %v1205
        %v1207 = vpop.f32.mrb[0].mxu0
        %1208 = vmatprep.mubr.bf16.mxu0 %v778
        %1209 = vmatmul.mubr.bf16.gmra.mrb[0].mxu0 %v777
        %v1210 = vpop.f32.mrb[0].mxu0
        %v1211 = vadd.f32 %v1018, %v1210
        %v1212 = vpop.f32.mrb[0].mxu0
        %v1213 = vpop.f32.mrb[0].mxu0
        %v1214 = vadd.f32 %v1021, %v1213
        %v1215 = vpop.f32.mrb[0].mxu0
        %1216 = vmatprep.mubr.bf16.mxu0 %v782
        %1217 = vmatmul.mubr.bf16.gmra.mrb[0].mxu0 %v781
        %v1218 = vpop.f32.mrb[0].mxu0
        %v1219 = vadd.f32 %v1026, %v1218
        %v1220 = vpop.f32.mrb[0].mxu0
        %v1221 = vpop.f32.mrb[0].mxu0
        %v1222 = vadd.f32 %v1029, %v1221
        %v1223 = vpop.f32.mrb[0].mxu0
        %1224 = vmatprep.mubr.bf16.mxu0 %v786
        %1225 = vmatmul.mubr.bf16.gmra.mrb[0].mxu0 %v785
        %v1226 = vpop.f32.mrb[0].mxu0
        %v1227 = vadd.f32 %v1034, %v1226
        %v1228 = vpop.f32.mrb[0].mxu0
        %v1229 = vpop.f32.mrb[0].mxu0
        %v1230 = vadd.f32 %v1037, %v1229
        %v1231 = vpop.f32.mrb[0].mxu0
        %1232 = vmatprep.mubr.bf16.mxu0 %v790
        %1233 = vmatmul.mubr.bf16.gmra.mrb[0].mxu0 %v789
        %v1234 = vpop.f32.mrb[0].mxu0
        %v1235 = vadd.f32 %v1042, %v1234
        %v1236 = vpop.f32.mrb[0].mxu0
        %v1237 = vpop.f32.mrb[0].mxu0
        %v1238 = vadd.f32 %v1045, %v1237
        %v1239 = vpop.f32.mrb[0].mxu0
        %1240 = vdwg.mxu0
        %v1241 = vadd.f32 %v375, %v1115
        %v1242 = vadd.f32 %v376, %v1118
        %v1243 = vadd.f32 %v377, %v1123
        %v1244 = vadd.f32 %v378, %v1126
        %v1245 = vadd.f32 %v379, %v1131
        %v1246 = vadd.f32 %v380, %v1134
        %v1247 = vadd.f32 %v381, %v1139
        %v1248 = vadd.f32 %v382, %v1142
        %v1249 = vadd.f32 %v383, %v1147
        %v1250 = vadd.f32 %v384, %v1150
        %v1251 = vadd.f32 %v385, %v1155
        %v1252 = vadd.f32 %v386, %v1158
        %v1253 = vadd.f32 %v387, %v1163
        %v1254 = vadd.f32 %v388, %v1166
        %v1255 = vadd.f32 %v389, %v1171
        %v1256 = vadd.f32 %v390, %v1174
        %v1257 = vadd.f32 %v391, %v1179
        %v1258 = vadd.f32 %v392, %v1182
        %v1259 = vadd.f32 %v393, %v1187
        %v1260 = vadd.f32 %v394, %v1190
        %v1261 = vadd.f32 %v395, %v1195
        %v1262 = vadd.f32 %v396, %v1198
        %v1263 = vadd.f32 %v397, %v1203
        %v1264 = vadd.f32 %v398, %v1206
        %v1265 = vadd.f32 %v399, %v1211
        %v1266 = vadd.f32 %v400, %v1214
        %v1267 = vadd.f32 %v401, %v1219
        %v1268 = vadd.f32 %v402, %v1222
        %v1269 = vadd.f32 %v403, %v1227
        %v1270 = vadd.f32 %v404, %v1230
        %v1271 = vadd.f32 %v405, %v1235
        %v1272 = vadd.f32 %v406, %v1238
        %1273 = vst [vmem:[#allocation2] sm:$0xff] %v1241
        %1274 = vst [vmem:[#allocation2 + $0x8] sm:$0xff] %v1242
        %1275 = vst [vmem:[#allocation2 + $0x10] sm:$0xff] %v1243
        %1276 = vst [vmem:[#allocation2 + $0x18] sm:$0xff] %v1244
        %1277 = vst [vmem:[#allocation2 + $0x20] sm:$0xff] %v1245
        %1278 = vst [vmem:[#allocation2 + $0x28] sm:$0xff] %v1246
        %1279 = vst [vmem:[#allocation2 + $0x30] sm:$0xff] %v1247
        %1280 = vst [vmem:[#allocation2 + $0x38] sm:$0xff] %v1248
        %1281 = vst [vmem:[#allocation2 + $0x40] sm:$0xff] %v1249
        %1282 = vst [vmem:[#allocation2 + $0x48] sm:$0xff] %v1250
        %1283 = vst [vmem:[#allocation2 + $0x50] sm:$0xff] %v1251
        %1284 = vst [vmem:[#allocation2 + $0x58] sm:$0xff] %v1252
        %1285 = vst [vmem:[#allocation2 + $0x60] sm:$0xff] %v1253
        %1286 = vst [vmem:[#allocation2 + $0x68] sm:$0xff] %v1254
        %1287 = vst [vmem:[#allocation2 + $0x70] sm:$0xff] %v1255
        %1288 = vst [vmem:[#allocation2 + $0x78] sm:$0xff] %v1256
        %1289 = vst [vmem:[#allocation2 + $0x80] sm:$0xff] %v1257
        %1290 = vst [vmem:[#allocation2 + $0x88] sm:$0xff] %v1258
        %1291 = vst [vmem:[#allocation2 + $0x90] sm:$0xff] %v1259
        %1292 = vst [vmem:[#allocation2 + $0x98] sm:$0xff] %v1260
        %1293 = vst [vmem:[#allocation2 + $0xa0] sm:$0xff] %v1261
        %1294 = vst [vmem:[#allocation2 + $0xa8] sm:$0xff] %v1262
        %1295 = vst [vmem:[#allocation2 + $0xb0] sm:$0xff] %v1263
        %1296 = vst [vmem:[#allocation2 + $0xb8] sm:$0xff] %v1264
        %1297 = vst [vmem:[#allocation2 + $0xc0] sm:$0xff] %v1265
        %1298 = vst [vmem:[#allocation2 + $0xc8] sm:$0xff] %v1266
        %1299 = vst [vmem:[#allocation2 + $0xd0] sm:$0xff] %v1267
        %1300 = vst [vmem:[#allocation2 + $0xd8] sm:$0xff] %v1268
        %1301 = vst [vmem:[#allocation2 + $0xe0] sm:$0xff] %v1269
        %1302 = vst [vmem:[#allocation2 + $0xe8] sm:$0xff] %v1270
        %1303 = vst [vmem:[#allocation2 + $0xf0] sm:$0xff] %v1271
        %1304 = vst [vmem:[#allocation2 + $0xf8] sm:$0xff] %v1272
        // Predicated region
        $region61: #{tpu_custom_call.1} parent=39 // pred_check
          %p1305 = pneg %p339
        $region62: #{tpu_custom_call.1} parent=39 // pred_check_branch
          %1307 = sbr.rel (%p1305) target = $region64
        $region63: #{tpu_custom_call.1} parent=39 // pred_region
          %v1308 = vld [vmem:[#allocation2] sm:$0xff]
          %v1309 = vld [vmem:[#allocation2 + $0x8] sm:$0xff]
          %v1310 = vld [vmem:[#allocation2 + $0x10] sm:$0xff]
          %v1311 = vld [vmem:[#allocation2 + $0x18] sm:$0xff]
          %v1312 = vld [vmem:[#allocation2 + $0x20] sm:$0xff]
          %v1313 = vld [vmem:[#allocation2 + $0x28] sm:$0xff]
          %v1314 = vld [vmem:[#allocation2 + $0x30] sm:$0xff]
          %v1315 = vld [vmem:[#allocation2 + $0x38] sm:$0xff]
          %v1316 = vld [vmem:[#allocation2 + $0x40] sm:$0xff]
          %v1317 = vld [vmem:[#allocation2 + $0x48] sm:$0xff]
          %v1318 = vld [vmem:[#allocation2 + $0x50] sm:$0xff]
          %v1319 = vld [vmem:[#allocation2 + $0x58] sm:$0xff]
          %v1320 = vld [vmem:[#allocation2 + $0x60] sm:$0xff]
          %v1321 = vld [vmem:[#allocation2 + $0x68] sm:$0xff]
          %v1322 = vld [vmem:[#allocation2 + $0x70] sm:$0xff]
          %v1323 = vld [vmem:[#allocation2 + $0x78] sm:$0xff]
          %v1324 = vld [vmem:[#allocation2 + $0x80] sm:$0xff]
          %v1325 = vld [vmem:[#allocation2 + $0x88] sm:$0xff]
          %v1326 = vld [vmem:[#allocation2 + $0x90] sm:$0xff]
          %v1327 = vld [vmem:[#allocation2 + $0x98] sm:$0xff]
          %v1328 = vld [vmem:[#allocation2 + $0xa0] sm:$0xff]
          %v1329 = vld [vmem:[#allocation2 + $0xa8] sm:$0xff]
          %v1330 = vld [vmem:[#allocation2 + $0xb0] sm:$0xff]
          %v1331 = vld [vmem:[#allocation2 + $0xb8] sm:$0xff]
          %v1332 = vld [vmem:[#allocation2 + $0xc0] sm:$0xff]
          %v1333 = vld [vmem:[#allocation2 + $0xc8] sm:$0xff]
          %v1334 = vld [vmem:[#allocation2 + $0xd0] sm:$0xff]
          %v1335 = vld [vmem:[#allocation2 + $0xd8] sm:$0xff]
          %v1336 = vld [vmem:[#allocation2 + $0xe0] sm:$0xff]
          %v1337 = vld [vmem:[#allocation2 + $0xe8] sm:$0xff]
          %v1338 = vld [vmem:[#allocation2 + $0xf0] sm:$0xff]
          %v1339 = vld [vmem:[#allocation2 + $0xf8] sm:$0xff]
          %v1340 = vmax.f32 %v1308, 1.0
          %v1341 = vmax.f32 %v1309, 1.0
          %v1342 = vmax.f32 %v1310, 1.0
          %v1343 = vmax.f32 %v1311, 1.0
          %v1344 = vmax.f32 %v1312, 1.0
          %v1345 = vmax.f32 %v1313, 1.0
          %v1346 = vmax.f32 %v1314, 1.0
          %v1347 = vmax.f32 %v1315, 1.0
          %v1348 = vmax.f32 %v1316, 1.0
          %v1349 = vmax.f32 %v1317, 1.0
          %v1350 = vmax.f32 %v1318, 1.0
          %v1351 = vmax.f32 %v1319, 1.0
          %v1352 = vmax.f32 %v1320, 1.0
          %v1353 = vmax.f32 %v1321, 1.0
          %v1354 = vmax.f32 %v1322, 1.0
          %v1355 = vmax.f32 %v1323, 1.0
          %v1356 = vmax.f32 %v1324, 1.0
          %v1357 = vmax.f32 %v1325, 1.0
          %v1358 = vmax.f32 %v1326, 1.0
          %v1359 = vmax.f32 %v1327, 1.0
          %v1360 = vmax.f32 %v1328, 1.0
          %v1361 = vmax.f32 %v1329, 1.0
          %v1362 = vmax.f32 %v1330, 1.0
          %v1363 = vmax.f32 %v1331, 1.0
          %v1364 = vmax.f32 %v1332, 1.0
          %v1365 = vmax.f32 %v1333, 1.0
          %v1366 = vmax.f32 %v1334, 1.0
          %v1367 = vmax.f32 %v1335, 1.0
          %v1368 = vmax.f32 %v1336, 1.0
          %v1369 = vmax.f32 %v1337, 1.0
          %v1370 = vmax.f32 %v1338, 1.0
          %v1371 = vmax.f32 %v1339, 1.0
          %v1372 = vrcp.pop %v1340
          %v1373 = vrcp.pop %v1341
          %v1374 = vrcp.pop %v1342
          %v1375 = vrcp.pop %v1343
          %v1376 = vrcp.pop %v1344
          %v1377 = vrcp.pop %v1345
          %v1378 = vrcp.pop %v1346
          %v1379 = vrcp.pop %v1347
          %v1380 = vrcp.pop %v1348
          %v1381 = vrcp.pop %v1349
          %v1382 = vrcp.pop %v1350
          %v1383 = vrcp.pop %v1351
          %v1384 = vrcp.pop %v1352
          %v1385 = vrcp.pop %v1353
          %v1386 = vrcp.pop %v1354
          %v1387 = vrcp.pop %v1355
          %v1388 = vrcp.pop %v1356
          %v1389 = vrcp.pop %v1357
          %v1390 = vrcp.pop %v1358
          %v1391 = vrcp.pop %v1359
          %v1392 = vrcp.pop %v1360
          %v1393 = vrcp.pop %v1361
          %v1394 = vrcp.pop %v1362
          %v1395 = vrcp.pop %v1363
          %v1396 = vrcp.pop %v1364
          %v1397 = vrcp.pop %v1365
          %v1398 = vrcp.pop %v1366
          %v1399 = vrcp.pop %v1367
          %v1400 = vrcp.pop %v1368
          %v1401 = vrcp.pop %v1369
          %v1402 = vrcp.pop %v1370
          %v1403 = vrcp.pop %v1371
          %v1404 = vmul.f32 %v1340, %v1372
          %v1405 = vmul.f32 %v1341, %v1373
          %v1406 = vmul.f32 %v1342, %v1374
          %v1407 = vmul.f32 %v1343, %v1375
          %v1408 = vmul.f32 %v1344, %v1376
          %v1409 = vmul.f32 %v1345, %v1377
          %v1410 = vmul.f32 %v1346, %v1378
          %v1411 = vmul.f32 %v1347, %v1379
          %v1412 = vmul.f32 %v1348, %v1380
          %v1413 = vmul.f32 %v1349, %v1381
          %v1414 = vmul.f32 %v1350, %v1382
          %v1415 = vmul.f32 %v1351, %v1383
          %v1416 = vmul.f32 %v1352, %v1384
          %v1417 = vmul.f32 %v1353, %v1385
          %v1418 = vmul.f32 %v1354, %v1386
          %v1419 = vmul.f32 %v1355, %v1387
          %v1420 = vmul.f32 %v1356, %v1388
          %v1421 = vmul.f32 %v1357, %v1389
          %v1422 = vmul.f32 %v1358, %v1390
          %v1423 = vmul.f32 %v1359, %v1391
          %v1424 = vmul.f32 %v1360, %v1392
          %v1425 = vmul.f32 %v1361, %v1393
          %v1426 = vmul.f32 %v1362, %v1394
          %v1427 = vmul.f32 %v1363, %v1395
          %v1428 = vmul.f32 %v1364, %v1396
          %v1429 = vmul.f32 %v1365, %v1397
          %v1430 = vmul.f32 %v1366, %v1398
          %v1431 = vmul.f32 %v1367, %v1399
          %v1432 = vmul.f32 %v1368, %v1400
          %v1433 = vmul.f32 %v1369, %v1401
          %v1434 = vmul.f32 %v1370, %v1402
          %v1435 = vmul.f32 %v1371, %v1403
          %v1436 = vsub.f32 2.0, %v1404
          %v1437 = vsub.f32 2.0, %v1405
          %v1438 = vsub.f32 2.0, %v1406
          %v1439 = vsub.f32 2.0, %v1407
          %v1440 = vsub.f32 2.0, %v1408
          %v1441 = vsub.f32 2.0, %v1409
          %v1442 = vsub.f32 2.0, %v1410
          %v1443 = vsub.f32 2.0, %v1411
          %v1444 = vsub.f32 2.0, %v1412
          %v1445 = vsub.f32 2.0, %v1413
          %v1446 = vsub.f32 2.0, %v1414
          %v1447 = vsub.f32 2.0, %v1415
          %v1448 = vsub.f32 2.0, %v1416
          %v1449 = vsub.f32 2.0, %v1417
          %v1450 = vsub.f32 2.0, %v1418
          %v1451 = vsub.f32 2.0, %v1419
          %v1452 = vsub.f32 2.0, %v1420
          %v1453 = vsub.f32 2.0, %v1421
          %v1454 = vsub.f32 2.0, %v1422
          %v1455 = vsub.f32 2.0, %v1423
          %v1456 = vsub.f32 2.0, %v1424
          %v1457 = vsub.f32 2.0, %v1425
          %v1458 = vsub.f32 2.0, %v1426
          %v1459 = vsub.f32 2.0, %v1427
          %v1460 = vsub.f32 2.0, %v1428
          %v1461 = vsub.f32 2.0, %v1429
          %v1462 = vsub.f32 2.0, %v1430
          %v1463 = vsub.f32 2.0, %v1431
          %v1464 = vsub.f32 2.0, %v1432
          %v1465 = vsub.f32 2.0, %v1433
          %v1466 = vsub.f32 2.0, %v1434
          %v1467 = vsub.f32 2.0, %v1435
          %v1468 = vmul.f32 %v1372, %v1436
          %v1469 = vmul.f32 %v1373, %v1437
          %v1470 = vmul.f32 %v1374, %v1438
          %v1471 = vmul.f32 %v1375, %v1439
          %v1472 = vmul.f32 %v1376, %v1440
          %v1473 = vmul.f32 %v1377, %v1441
          %v1474 = vmul.f32 %v1378, %v1442
          %v1475 = vmul.f32 %v1379, %v1443
          %v1476 = vmul.f32 %v1380, %v1444
          %v1477 = vmul.f32 %v1381, %v1445
          %v1478 = vmul.f32 %v1382, %v1446
          %v1479 = vmul.f32 %v1383, %v1447
          %v1480 = vmul.f32 %v1384, %v1448
          %v1481 = vmul.f32 %v1385, %v1449
          %v1482 = vmul.f32 %v1386, %v1450
          %v1483 = vmul.f32 %v1387, %v1451
          %v1484 = vmul.f32 %v1388, %v1452
          %v1485 = vmul.f32 %v1389, %v1453
          %v1486 = vmul.f32 %v1390, %v1454
          %v1487 = vmul.f32 %v1391, %v1455
          %v1488 = vmul.f32 %v1392, %v1456
          %v1489 = vmul.f32 %v1393, %v1457
          %v1490 = vmul.f32 %v1394, %v1458
          %v1491 = vmul.f32 %v1395, %v1459
          %v1492 = vmul.f32 %v1396, %v1460
          %v1493 = vmul.f32 %v1397, %v1461
          %v1494 = vmul.f32 %v1398, %v1462
          %v1495 = vmul.f32 %v1399, %v1463
          %v1496 = vmul.f32 %v1400, %v1464
          %v1497 = vmul.f32 %v1401, %v1465
          %v1498 = vmul.f32 %v1402, %v1466
          %v1499 = vmul.f32 %v1403, %v1467
          %1501 = vset.pattern.permute.xlu0 32
          %1502 = vperm.xlu0 %1501, %v1468
          %v1503 = vpop.permute.xlu0 %1502
          %1506 = vset.pattern.permute.xlu0 32
          %1507 = vperm.xlu0 %1506, %v1469
          %v1508 = vpop.permute.xlu0 %1507
          %1511 = vset.pattern.permute.xlu0 32
          %1512 = vperm.xlu0 %1511, %v1470
          %v1513 = vpop.permute.xlu0 %1512
          %1516 = vset.pattern.permute.xlu0 32
          %1517 = vperm.xlu0 %1516, %v1471
          %v1518 = vpop.permute.xlu0 %1517
          %1521 = vset.pattern.permute.xlu0 32
          %1522 = vperm.xlu0 %1521, %v1472
          %v1523 = vpop.permute.xlu0 %1522
          %1526 = vset.pattern.permute.xlu0 32
          %1527 = vperm.xlu0 %1526, %v1473
          %v1528 = vpop.permute.xlu0 %1527
          %1531 = vset.pattern.permute.xlu0 32
          %1532 = vperm.xlu0 %1531, %v1474
          %v1533 = vpop.permute.xlu0 %1532
          %1536 = vset.pattern.permute.xlu0 32
          %1537 = vperm.xlu0 %1536, %v1475
          %v1538 = vpop.permute.xlu0 %1537
          %1541 = vset.pattern.permute.xlu0 32
          %1542 = vperm.xlu0 %1541, %v1476
          %v1543 = vpop.permute.xlu0 %1542
          %1546 = vset.pattern.permute.xlu0 32
          %1547 = vperm.xlu0 %1546, %v1477
          %v1548 = vpop.permute.xlu0 %1547
          %1551 = vset.pattern.permute.xlu0 32
          %1552 = vperm.xlu0 %1551, %v1478
          %v1553 = vpop.permute.xlu0 %1552
          %1556 = vset.pattern.permute.xlu0 32
          %1557 = vperm.xlu0 %1556, %v1479
          %v1558 = vpop.permute.xlu0 %1557
          %1561 = vset.pattern.permute.xlu0 32
          %1562 = vperm.xlu0 %1561, %v1480
          %v1563 = vpop.permute.xlu0 %1562
          %1566 = vset.pattern.permute.xlu0 32
          %1567 = vperm.xlu0 %1566, %v1481
          %v1568 = vpop.permute.xlu0 %1567
          %1571 = vset.pattern.permute.xlu0 32
          %1572 = vperm.xlu0 %1571, %v1482
          %v1573 = vpop.permute.xlu0 %1572
          %1576 = vset.pattern.permute.xlu0 32
          %1577 = vperm.xlu0 %1576, %v1483
          %v1578 = vpop.permute.xlu0 %1577
          %1581 = vset.pattern.permute.xlu0 32
          %1582 = vperm.xlu0 %1581, %v1484
          %v1583 = vpop.permute.xlu0 %1582
          %1586 = vset.pattern.permute.xlu0 32
          %1587 = vperm.xlu0 %1586, %v1485
          %v1588 = vpop.permute.xlu0 %1587
          %1591 = vset.pattern.permute.xlu0 32
          %1592 = vperm.xlu0 %1591, %v1486
          %v1593 = vpop.permute.xlu0 %1592
          %1596 = vset.pattern.permute.xlu0 32
          %1597 = vperm.xlu0 %1596, %v1487
          %v1598 = vpop.permute.xlu0 %1597
          %1601 = vset.pattern.permute.xlu0 32
          %1602 = vperm.xlu0 %1601, %v1488
          %v1603 = vpop.permute.xlu0 %1602
          %1606 = vset.pattern.permute.xlu0 32
          %1607 = vperm.xlu0 %1606, %v1489
          %v1608 = vpop.permute.xlu0 %1607
          %1611 = vset.pattern.permute.xlu0 32
          %1612 = vperm.xlu0 %1611, %v1490
          %v1613 = vpop.permute.xlu0 %1612
          %1616 = vset.pattern.permute.xlu0 32
          %1617 = vperm.xlu0 %1616, %v1491
          %v1618 = vpop.permute.xlu0 %1617
          %1621 = vset.pattern.permute.xlu0 32
          %1622 = vperm.xlu0 %1621, %v1492
          %v1623 = vpop.permute.xlu0 %1622
          %1626 = vset.pattern.permute.xlu0 32
          %1627 = vperm.xlu0 %1626, %v1493
          %v1628 = vpop.permute.xlu0 %1627
          %1631 = vset.pattern.permute.xlu0 32
          %1632 = vperm.xlu0 %1631, %v1494
          %v1633 = vpop.permute.xlu0 %1632
          %1636 = vset.pattern.permute.xlu0 32
          %1637 = vperm.xlu0 %1636, %v1495
          %v1638 = vpop.permute.xlu0 %1637
          %1641 = vset.pattern.permute.xlu0 32
          %1642 = vperm.xlu0 %1641, %v1496
          %v1643 = vpop.permute.xlu0 %1642
          %1646 = vset.pattern.permute.xlu0 32
          %1647 = vperm.xlu0 %1646, %v1497
          %v1648 = vpop.permute.xlu0 %1647
          %1651 = vset.pattern.permute.xlu0 32
          %1652 = vperm.xlu0 %1651, %v1498
          %v1653 = vpop.permute.xlu0 %1652
          %1656 = vset.pattern.permute.xlu0 32
          %1657 = vperm.xlu0 %1656, %v1499
          %v1658 = vpop.permute.xlu0 %1657
          %v1660 = vmul.f32 %v1308, %v1503
          %v1661 = vmul.f32 %v1309, %v1508
          %v1662 = vmul.f32 %v1310, %v1513
          %v1663 = vmul.f32 %v1311, %v1518
          %v1664 = vmul.f32 %v1312, %v1523
          %v1665 = vmul.f32 %v1313, %v1528
          %v1666 = vmul.f32 %v1314, %v1533
          %v1667 = vmul.f32 %v1315, %v1538
          %v1668 = vmul.f32 %v1316, %v1543
          %v1669 = vmul.f32 %v1317, %v1548
          %v1670 = vmul.f32 %v1318, %v1553
          %v1671 = vmul.f32 %v1319, %v1558
          %v1672 = vmul.f32 %v1320, %v1563
          %v1673 = vmul.f32 %v1321, %v1568
          %v1674 = vmul.f32 %v1322, %v1573
          %v1675 = vmul.f32 %v1323, %v1578
          %v1676 = vmul.f32 %v1324, %v1583
          %v1677 = vmul.f32 %v1325, %v1588
          %v1678 = vmul.f32 %v1326, %v1593
          %v1679 = vmul.f32 %v1327, %v1598
          %v1680 = vmul.f32 %v1328, %v1603
          %v1681 = vmul.f32 %v1329, %v1608
          %v1682 = vmul.f32 %v1330, %v1613
          %v1683 = vmul.f32 %v1331, %v1618
          %v1684 = vmul.f32 %v1332, %v1623
          %v1685 = vmul.f32 %v1333, %v1628
          %v1686 = vmul.f32 %v1334, %v1633
          %v1687 = vmul.f32 %v1335, %v1638
          %v1688 = vmul.f32 %v1336, %v1643
          %v1689 = vmul.f32 %v1337, %v1648
          %v1690 = vmul.f32 %v1338, %v1653
          %v1691 = vmul.f32 %v1339, %v1658
          %v1692 = vld [vmem:[%s298] sm:$0xff]
          %v1693 = vld [vmem:[%s298 + $0x8] sm:$0xff]
          %v1694 = vld [vmem:[%s298 + $0x10] sm:$0xff]
          %v1695 = vld [vmem:[%s298 + $0x18] sm:$0xff]
          %v1696 = vld [vmem:[%s298 + $0x20] sm:$0xff]
          %v1697 = vld [vmem:[%s298 + $0x28] sm:$0xff]
          %v1698 = vld [vmem:[%s298 + $0x30] sm:$0xff]
          %v1699 = vld [vmem:[%s298 + $0x38] sm:$0xff]
          %v1700 = vld [vmem:[%s298 + $0x40] sm:$0xff]
          %v1701 = vld [vmem:[%s298 + $0x48] sm:$0xff]
          %v1702 = vld [vmem:[%s298 + $0x50] sm:$0xff]
          %v1703 = vld [vmem:[%s298 + $0x58] sm:$0xff]
          %v1704 = vld [vmem:[%s298 + $0x60] sm:$0xff]
          %v1705 = vld [vmem:[%s298 + $0x68] sm:$0xff]
          %v1706 = vld [vmem:[%s298 + $0x70] sm:$0xff]
          %v1707 = vld [vmem:[%s298 + $0x78] sm:$0xff]
          %v1708 = vld [vmem:[%s298 + $0x80] sm:$0xff]
          %v1709 = vld [vmem:[%s298 + $0x88] sm:$0xff]
          %v1710 = vld [vmem:[%s298 + $0x90] sm:$0xff]
          %v1711 = vld [vmem:[%s298 + $0x98] sm:$0xff]
          %v1712 = vld [vmem:[%s298 + $0xa0] sm:$0xff]
          %v1713 = vld [vmem:[%s298 + $0xa8] sm:$0xff]
          %v1714 = vld [vmem:[%s298 + $0xb0] sm:$0xff]
          %v1715 = vld [vmem:[%s298 + $0xb8] sm:$0xff]
          %v1716 = vld [vmem:[%s298 + $0xc0] sm:$0xff]
          %v1717 = vld [vmem:[%s298 + $0xc8] sm:$0xff]
          %v1718 = vld [vmem:[%s298 + $0xd0] sm:$0xff]
          %v1719 = vld [vmem:[%s298 + $0xd8] sm:$0xff]
          %v1720 = vld [vmem:[%s298 + $0xe0] sm:$0xff]
          %v1721 = vld [vmem:[%s298 + $0xe8] sm:$0xff]
          %v1722 = vld [vmem:[%s298 + $0xf0] sm:$0xff]
          %v1723 = vld [vmem:[%s298 + $0xf8] sm:$0xff]
          %v1724 = vadd.f32 %v1692, %v1660
          %v1725 = vadd.f32 %v1693, %v1661
          %v1726 = vadd.f32 %v1694, %v1662
          %v1727 = vadd.f32 %v1695, %v1663
          %v1728 = vadd.f32 %v1696, %v1664
          %v1729 = vadd.f32 %v1697, %v1665
          %v1730 = vadd.f32 %v1698, %v1666
          %v1731 = vadd.f32 %v1699, %v1667
          %v1732 = vadd.f32 %v1700, %v1668
          %v1733 = vadd.f32 %v1701, %v1669
          %v1734 = vadd.f32 %v1702, %v1670
          %v1735 = vadd.f32 %v1703, %v1671
          %v1736 = vadd.f32 %v1704, %v1672
          %v1737 = vadd.f32 %v1705, %v1673
          %v1738 = vadd.f32 %v1706, %v1674
          %v1739 = vadd.f32 %v1707, %v1675
          %v1740 = vadd.f32 %v1708, %v1676
          %v1741 = vadd.f32 %v1709, %v1677
          %v1742 = vadd.f32 %v1710, %v1678
          %v1743 = vadd.f32 %v1711, %v1679
          %v1744 = vadd.f32 %v1712, %v1680
          %v1745 = vadd.f32 %v1713, %v1681
          %v1746 = vadd.f32 %v1714, %v1682
          %v1747 = vadd.f32 %v1715, %v1683
          %v1748 = vadd.f32 %v1716, %v1684
          %v1749 = vadd.f32 %v1717, %v1685
          %v1750 = vadd.f32 %v1718, %v1686
          %v1751 = vadd.f32 %v1719, %v1687
          %v1752 = vadd.f32 %v1720, %v1688
          %v1753 = vadd.f32 %v1721, %v1689
          %v1754 = vadd.f32 %v1722, %v1690
          %v1755 = vadd.f32 %v1723, %v1691
          %v1756 = vld [vmem:[#allocation9] sm:$0xff]
          %v1757 = vld [vmem:[#allocation9 + $0x8] sm:$0xff]
          %v1758 = vld [vmem:[#allocation9 + $0x10] sm:$0xff]
          %v1759 = vld [vmem:[#allocation9 + $0x18] sm:$0xff]
          %v1760 = vld [vmem:[#allocation9 + $0x20] sm:$0xff]
          %v1761 = vld [vmem:[#allocation9 + $0x28] sm:$0xff]
          %v1762 = vld [vmem:[#allocation9 + $0x30] sm:$0xff]
          %v1763 = vld [vmem:[#allocation9 + $0x38] sm:$0xff]
          %v1764 = vld [vmem:[#allocation9 + $0x40] sm:$0xff]
          %v1765 = vld [vmem:[#allocation9 + $0x48] sm:$0xff]
          %v1766 = vld [vmem:[#allocation9 + $0x50] sm:$0xff]
          %v1767 = vld [vmem:[#allocation9 + $0x58] sm:$0xff]
          %v1768 = vld [vmem:[#allocation9 + $0x60] sm:$0xff]
          %v1769 = vld [vmem:[#allocation9 + $0x68] sm:$0xff]
          %v1770 = vld [vmem:[#allocation9 + $0x70] sm:$0xff]
          %v1771 = vld [vmem:[#allocation9 + $0x78] sm:$0xff]
          %v1772 = vld [vmem:[%s4] sm:$0x1]
          %v1774 = vlaneseq
          %v1775 = vshrl.u32 %v1774, 7
          %v1776 = vsub.s32 0, %v1775
          %v1777 = vrot.slane %v1772, %v1776
          %1779 = vmatprep.subr.mxu0 0.0
          %1780 = vmatpush1.msra.mxu0 %v1756
          %1781 = vmatprep.subr.mxu0 0.0
          %1782 = vmatpush1.msra.mxu0 %v1757
          %1783 = vmatprep.subr.mxu0 0.0
          %1784 = vmatpush1.msra.mxu0 %v1758
          %1785 = vmatprep.subr.mxu0 0.0
          %1786 = vmatpush1.msra.mxu0 %v1759
          %1787 = vmatprep.subr.mxu0 0.0
          %1788 = vmatpush1.msra.mxu0 %v1760
          %1789 = vmatprep.subr.mxu0 0.0
          %1790 = vmatpush1.msra.mxu0 %v1761
          %1791 = vmatprep.subr.mxu0 0.0
          %1792 = vmatpush1.msra.mxu0 %v1762
          %1793 = vmatprep.subr.mxu0 0.0
          %1794 = vmatpush1.msra.mxu0 %v1763
          %1795 = vmatprep.subr.mxu0 0.0
          %1796 = vmatpush1.msra.mxu0 %v1764
          %1797 = vmatprep.subr.mxu0 0.0
          %1798 = vmatpush1.msra.mxu0 %v1765
          %1799 = vmatprep.subr.mxu0 0.0
          %1800 = vmatpush1.msra.mxu0 %v1766
          %1801 = vmatprep.subr.mxu0 0.0
          %1802 = vmatpush1.msra.mxu0 %v1767
          %1803 = vmatprep.subr.mxu0 0.0
          %1804 = vmatpush1.msra.mxu0 %v1768
          %1805 = vmatprep.subr.mxu0 0.0
          %1806 = vmatpush1.msra.mxu0 %v1769
          %1807 = vmatprep.subr.mxu0 0.0
          %1808 = vmatpush1.msra.mxu0 %v1770
          %1809 = vmatprep.subr.mxu0 0.0
          %1810 = vmatpush1.msra.mxu0 %v1771
          %1811 = vmatprep.subr.mxu0 0.0
          %1812 = vmatpush1.msra.mxu0 0.0
          %1813 = vmatprep.subr.mxu0 0.0
          %1814 = vmatpush1.msra.mxu0 0.0
          %1815 = vmatprep.subr.mxu0 0.0
          %1816 = vmatpush1.msra.mxu0 0.0
          %1817 = vmatprep.subr.mxu0 0.0
          %1818 = vmatpush1.msra.mxu0 0.0
          %1819 = vmatprep.subr.mxu0 0.0
          %1820 = vmatpush1.msra.mxu0 0.0
          %1821 = vmatprep.subr.mxu0 0.0
          %1822 = vmatpush1.msra.mxu0 0.0
          %1823 = vmatprep.subr.mxu0 0.0
          %1824 = vmatpush1.msra.mxu0 0.0
          %1825 = vmatprep.subr.mxu0 0.0
          %1826 = vmatpush1.msra.mxu0 0.0
          %1827 = vmatprep.subr.mxu0 0.0
          %1828 = vmatpush1.msra.mxu0 0.0
          %1829 = vmatprep.subr.mxu0 0.0
          %1830 = vmatpush1.msra.mxu0 0.0
          %1831 = vmatprep.subr.mxu0 0.0
          %1832 = vmatpush1.msra.mxu0 0.0
          %1833 = vmatprep.subr.mxu0 0.0
          %1834 = vmatpush1.msra.mxu0 0.0
          %1835 = vmatprep.subr.mxu0 0.0
          %1836 = vmatpush1.msra.mxu0 0.0
          %1837 = vmatprep.subr.mxu0 0.0
          %1838 = vmatpush1.msra.mxu0 0.0
          %1839 = vmatprep.subr.mxu0 0.0
          %1840 = vmatpush1.msra.mxu0 0.0
          %1841 = vmatprep.subr.mxu0 0.0
          %1842 = vmatpush1.msra.mxu0 0.0
          %1843 = vmatprep.mubr.f32.mxu0 0.0
          %1844 = vmatmul.mubr.f32.gmra.mrb[0].mxu0 %v1724
          %v1845 = vpop.f32.mrb[0].mxu0
          %v1846 = vadd.f32 %v1777, %v1845
          %v1847 = vpop.f32.mrb[0].mxu0
          %1848 = vmatprep.mubr.f32.mxu0 0.0
          %1849 = vmatmul.mubr.f32.gmra.mrb[0].mxu0 %v1725
          %v1850 = vpop.f32.mrb[0].mxu0
          %v1851 = vadd.f32 %v1777, %v1850
          %v1852 = vpop.f32.mrb[0].mxu0
          %1853 = vmatprep.mubr.f32.mxu0 0.0
          %1854 = vmatmul.mubr.f32.gmra.mrb[0].mxu0 %v1726
          %v1855 = vpop.f32.mrb[0].mxu0
          %v1856 = vadd.f32 %v1777, %v1855
          %v1857 = vpop.f32.mrb[0].mxu0
          %1858 = vmatprep.mubr.f32.mxu0 0.0
          %1859 = vmatmul.mubr.f32.gmra.mrb[0].mxu0 %v1727
          %v1860 = vpop.f32.mrb[0].mxu0
          %v1861 = vadd.f32 %v1777, %v1860
          %v1862 = vpop.f32.mrb[0].mxu0
          %1863 = vmatprep.mubr.f32.mxu0 0.0
          %1864 = vmatmul.mubr.f32.gmra.mrb[0].mxu0 %v1728
          %v1865 = vpop.f32.mrb[0].mxu0
          %v1866 = vadd.f32 %v1777, %v1865
          %v1867 = vpop.f32.mrb[0].mxu0
          %1868 = vmatprep.mubr.f32.mxu0 0.0
          %1869 = vmatmul.mubr.f32.gmra.mrb[0].mxu0 %v1729
          %v1870 = vpop.f32.mrb[0].mxu0
          %v1871 = vadd.f32 %v1777, %v1870
          %v1872 = vpop.f32.mrb[0].mxu0
          %1873 = vmatprep.mubr.f32.mxu0 0.0
          %1874 = vmatmul.mubr.f32.gmra.mrb[0].mxu0 %v1730
          %v1875 = vpop.f32.mrb[0].mxu0
          %v1876 = vadd.f32 %v1777, %v1875
          %v1877 = vpop.f32.mrb[0].mxu0
          %1878 = vmatprep.mubr.f32.mxu0 0.0
          %1879 = vmatmul.mubr.f32.gmra.mrb[0].mxu0 %v1731
          %v1880 = vpop.f32.mrb[0].mxu0
          %v1881 = vadd.f32 %v1777, %v1880
          %v1882 = vpop.f32.mrb[0].mxu0
          %1883 = vmatprep.mubr.f32.mxu0 0.0
          %1884 = vmatmul.mubr.f32.gmra.mrb[0].mxu0 %v1732
          %v1885 = vpop.f32.mrb[0].mxu0
          %v1886 = vadd.f32 %v1777, %v1885
          %v1887 = vpop.f32.mrb[0].mxu0
          %1888 = vmatprep.mubr.f32.mxu0 0.0
          %1889 = vmatmul.mubr.f32.gmra.mrb[0].mxu0 %v1733
          %v1890 = vpop.f32.mrb[0].mxu0
          %v1891 = vadd.f32 %v1777, %v1890
          %v1892 = vpop.f32.mrb[0].mxu0
          %1893 = vmatprep.mubr.f32.mxu0 0.0
          %1894 = vmatmul.mubr.f32.gmra.mrb[0].mxu0 %v1734
          %v1895 = vpop.f32.mrb[0].mxu0
          %v1896 = vadd.f32 %v1777, %v1895
          %v1897 = vpop.f32.mrb[0].mxu0
          %1898 = vmatprep.mubr.f32.mxu0 0.0
          %1899 = vmatmul.mubr.f32.gmra.mrb[0].mxu0 %v1735
          %v1900 = vpop.f32.mrb[0].mxu0
          %v1901 = vadd.f32 %v1777, %v1900
          %v1902 = vpop.f32.mrb[0].mxu0
          %1903 = vmatprep.mubr.f32.mxu0 0.0
          %1904 = vmatmul.mubr.f32.gmra.mrb[0].mxu0 %v1736
          %v1905 = vpop.f32.mrb[0].mxu0
          %v1906 = vadd.f32 %v1777, %v1905
          %v1907 = vpop.f32.mrb[0].mxu0
          %1908 = vmatprep.mubr.f32.mxu0 0.0
          %1909 = vmatmul.mubr.f32.gmra.mrb[0].mxu0 %v1737
          %v1910 = vpop.f32.mrb[0].mxu0
          %v1911 = vadd.f32 %v1777, %v1910
          %v1912 = vpop.f32.mrb[0].mxu0
          %1913 = vmatprep.mubr.f32.mxu0 0.0
          %1914 = vmatmul.mubr.f32.gmra.mrb[0].mxu0 %v1738
          %v1915 = vpop.f32.mrb[0].mxu0
          %v1916 = vadd.f32 %v1777, %v1915
          %v1917 = vpop.f32.mrb[0].mxu0
          %1918 = vmatprep.mubr.f32.mxu0 0.0
          %1919 = vmatmul.mubr.f32.gmra.mrb[0].mxu0 %v1739
          %v1920 = vpop.f32.mrb[0].mxu0
          %v1921 = vadd.f32 %v1777, %v1920
          %v1922 = vpop.f32.mrb[0].mxu0
          %1923 = vmatprep.mubr.f32.mxu0 0.0
          %1924 = vmatmul.mubr.f32.gmra.mrb[0].mxu0 %v1740
          %v1925 = vpop.f32.mrb[0].mxu0
          %v1926 = vadd.f32 %v1777, %v1925
          %v1927 = vpop.f32.mrb[0].mxu0
          %1928 = vmatprep.mubr.f32.mxu0 0.0
          %1929 = vmatmul.mubr.f32.gmra.mrb[0].mxu0 %v1741
          %v1930 = vpop.f32.mrb[0].mxu0
          %v1931 = vadd.f32 %v1777, %v1930
          %v1932 = vpop.f32.mrb[0].mxu0
          %1933 = vmatprep.mubr.f32.mxu0 0.0
          %1934 = vmatmul.mubr.f32.gmra.mrb[0].mxu0 %v1742
          %v1935 = vpop.f32.mrb[0].mxu0
          %v1936 = vadd.f32 %v1777, %v1935
          %v1937 = vpop.f32.mrb[0].mxu0
          %1938 = vmatprep.mubr.f32.mxu0 0.0
          %1939 = vmatmul.mubr.f32.gmra.mrb[0].mxu0 %v1743
          %v1940 = vpop.f32.mrb[0].mxu0
          %v1941 = vadd.f32 %v1777, %v1940
          %v1942 = vpop.f32.mrb[0].mxu0
          %1943 = vmatprep.mubr.f32.mxu0 0.0
          %1944 = vmatmul.mubr.f32.gmra.mrb[0].mxu0 %v1744
          %v1945 = vpop.f32.mrb[0].mxu0
          %v1946 = vadd.f32 %v1777, %v1945
          %v1947 = vpop.f32.mrb[0].mxu0
          %1948 = vmatprep.mubr.f32.mxu0 0.0
          %1949 = vmatmul.mubr.f32.gmra.mrb[0].mxu0 %v1745
          %v1950 = vpop.f32.mrb[0].mxu0
          %v1951 = vadd.f32 %v1777, %v1950
          %v1952 = vpop.f32.mrb[0].mxu0
          %1953 = vmatprep.mubr.f32.mxu0 0.0
          %1954 = vmatmul.mubr.f32.gmra.mrb[0].mxu0 %v1746
          %v1955 = vpop.f32.mrb[0].mxu0
          %v1956 = vadd.f32 %v1777, %v1955
          %v1957 = vpop.f32.mrb[0].mxu0
          %1958 = vmatprep.mubr.f32.mxu0 0.0
          %1959 = vmatmul.mubr.f32.gmra.mrb[0].mxu0 %v1747
          %v1960 = vpop.f32.mrb[0].mxu0
          %v1961 = vadd.f32 %v1777, %v1960
          %v1962 = vpop.f32.mrb[0].mxu0
          %1963 = vmatprep.mubr.f32.mxu0 0.0
          %1964 = vmatmul.mubr.f32.gmra.mrb[0].mxu0 %v1748
          %v1965 = vpop.f32.mrb[0].mxu0
          %v1966 = vadd.f32 %v1777, %v1965
          %v1967 = vpop.f32.mrb[0].mxu0
          %1968 = vmatprep.mubr.f32.mxu0 0.0
          %1969 = vmatmul.mubr.f32.gmra.mrb[0].mxu0 %v1749
          %v1970 = vpop.f32.mrb[0].mxu0
          %v1971 = vadd.f32 %v1777, %v1970
          %v1972 = vpop.f32.mrb[0].mxu0
          %1973 = vmatprep.mubr.f32.mxu0 0.0
          %1974 = vmatmul.mubr.f32.gmra.mrb[0].mxu0 %v1750
          %v1975 = vpop.f32.mrb[0].mxu0
          %v1976 = vadd.f32 %v1777, %v1975
          %v1977 = vpop.f32.mrb[0].mxu0
          %1978 = vmatprep.mubr.f32.mxu0 0.0
          %1979 = vmatmul.mubr.f32.gmra.mrb[0].mxu0 %v1751
          %v1980 = vpop.f32.mrb[0].mxu0
          %v1981 = vadd.f32 %v1777, %v1980
          %v1982 = vpop.f32.mrb[0].mxu0
          %1983 = vmatprep.mubr.f32.mxu0 0.0
          %1984 = vmatmul.mubr.f32.gmra.mrb[0].mxu0 %v1752
          %v1985 = vpop.f32.mrb[0].mxu0
          %v1986 = vadd.f32 %v1777, %v1985
          %v1987 = vpop.f32.mrb[0].mxu0
          %1988 = vmatprep.mubr.f32.mxu0 0.0
          %1989 = vmatmul.mubr.f32.gmra.mrb[0].mxu0 %v1753
          %v1990 = vpop.f32.mrb[0].mxu0
          %v1991 = vadd.f32 %v1777, %v1990
          %v1992 = vpop.f32.mrb[0].mxu0
          %1993 = vmatprep.mubr.f32.mxu0 0.0
          %1994 = vmatmul.mubr.f32.gmra.mrb[0].mxu0 %v1754
          %v1995 = vpop.f32.mrb[0].mxu0
          %v1996 = vadd.f32 %v1777, %v1995
          %v1997 = vpop.f32.mrb[0].mxu0
          %1998 = vmatprep.mubr.f32.mxu0 0.0
          %1999 = vmatmul.mubr.f32.gmra.mrb[0].mxu0 %v1755
          %v2000 = vpop.f32.mrb[0].mxu0
          %v2001 = vadd.f32 %v1777, %v2000
          %v2002 = vpop.f32.mrb[0].mxu0
          %2003 = vdwg.mxu0
          %2004 = vst [vmem:[%s333] sm:$0xff] %v1846
          %2005 = vst [vmem:[%s333 + $0x8] sm:$0xff] %v1851
          %2006 = vst [vmem:[%s333 + $0x10] sm:$0xff] %v1856
          %2007 = vst [vmem:[%s333 + $0x18] sm:$0xff] %v1861
          %2008 = vst [vmem:[%s333 + $0x20] sm:$0xff] %v1866
          %2009 = vst [vmem:[%s333 + $0x28] sm:$0xff] %v1871
          %2010 = vst [vmem:[%s333 + $0x30] sm:$0xff] %v1876
          %2011 = vst [vmem:[%s333 + $0x38] sm:$0xff] %v1881
          %2012 = vst [vmem:[%s333 + $0x40] sm:$0xff] %v1886
          %2013 = vst [vmem:[%s333 + $0x48] sm:$0xff] %v1891
          %2014 = vst [vmem:[%s333 + $0x50] sm:$0xff] %v1896
          %2015 = vst [vmem:[%s333 + $0x58] sm:$0xff] %v1901
          %2016 = vst [vmem:[%s333 + $0x60] sm:$0xff] %v1906
          %2017 = vst [vmem:[%s333 + $0x68] sm:$0xff] %v1911
          %2018 = vst [vmem:[%s333 + $0x70] sm:$0xff] %v1916
          %2019 = vst [vmem:[%s333 + $0x78] sm:$0xff] %v1921
          %2020 = vst [vmem:[%s333 + $0x80] sm:$0xff] %v1926
          %2021 = vst [vmem:[%s333 + $0x88] sm:$0xff] %v1931
          %2022 = vst [vmem:[%s333 + $0x90] sm:$0xff] %v1936
          %2023 = vst [vmem:[%s333 + $0x98] sm:$0xff] %v1941
          %2024 = vst [vmem:[%s333 + $0xa0] sm:$0xff] %v1946
          %2025 = vst [vmem:[%s333 + $0xa8] sm:$0xff] %v1951
          %2026 = vst [vmem:[%s333 + $0xb0] sm:$0xff] %v1956
          %2027 = vst [vmem:[%s333 + $0xb8] sm:$0xff] %v1961
          %2028 = vst [vmem:[%s333 + $0xc0] sm:$0xff] %v1966
          %2029 = vst [vmem:[%s333 + $0xc8] sm:$0xff] %v1971
          %2030 = vst [vmem:[%s333 + $0xd0] sm:$0xff] %v1976
          %2031 = vst [vmem:[%s333 + $0xd8] sm:$0xff] %v1981
          %2032 = vst [vmem:[%s333 + $0xe0] sm:$0xff] %v1986
          %2033 = vst [vmem:[%s333 + $0xe8] sm:$0xff] %v1991
          %2034 = vst [vmem:[%s333 + $0xf0] sm:$0xff] %v1996
          %2035 = vst [vmem:[%s333 + $0xf8] sm:$0xff] %v2001
        $region64: #{tpu_custom_call.1} parent=39 // pred_fallthru
          _
        %s2036 = sand.u32 %s165, 1
        %s2037 = scalar_lea.sflag [#allocation5], %s2036
        %s2038 = sand.u32 %s165, 1
        %s2039 = smul.addr %s2038, 256
        %s2040 = scalar_lea.vmem [#allocation10], %s2039
        // Predicated region
        $region65: #{tpu_custom_call.1} parent=39 // pred_check
          %p2041 = pneg %p175
        $region66: #{tpu_custom_call.1} parent=39 // pred_check_branch
          %2043 = sbr.rel (%p2041) target = $region68
        $region67: #{tpu_custom_call.1} parent=39 // pred_region
          %s2044 = smul.u32 32, %s27
          %s2046 = ssub.s32 4096, 4096
          %2047 = vsyncadd %s2037, %s2046
          %s2048 = smul.addr %s2044, 128
          %s2049 = scalar_lea.hbm %s5, %s2048
          %s2050 = sshll.u32 %s2040, 4
          %s2051 = int_to_ptr.vmem [resolvable:$true] %s2050
          %2056 = dma.vmem_to_hbm [thread:$0]  %s2051, 4096, %s2049, %s2037, 128, 128, 8
        $region68: #{tpu_custom_call.1} parent=39 // pred_fallthru
          _
      $region40: #{tpu_custom_call.1} parent=5 // pred_fallthru
        _
      %p2057 = scmp.le.s32.totalorder 2, %s18
      // Predicated region
      $region69: #{tpu_custom_call.1} parent=5 // pred_check
        %p2058 = pneg %p2057
      $region70: #{tpu_custom_call.1} parent=5 // pred_check_branch
        %2060 = sbr.rel (%p2058) target = $region72
      $region71: #{tpu_custom_call.1} parent=5 // pred_region
        %s2061 = ssub.s32 %s18, 2
        // Predicated region
        $region73: #{tpu_custom_call.1} parent=71 // pred_check
          %p2062 = pneg %p181
        $region74: #{tpu_custom_call.1} parent=71 // pred_check_branch
          %2064 = sbr.rel (%p2062) target = $region76
        $region75: #{tpu_custom_call.1} parent=71 // pred_region
          %s2065 = sand.u32 %s166, 1
          %s2066 = scalar_lea.sflag [#allocation5], %s2065
          %s2067 = sand.u32 %s166, 1
          %s2068 = smul.addr %s2067, 256
          %s2069 = scalar_lea.vmem [#allocation10], %s2068
          %2070 = dma.done %s2066, 4096
        $region76: #{tpu_custom_call.1} parent=71 // pred_fallthru
          _
      $region72: #{tpu_custom_call.1} parent=5 // pred_fallthru
        _
    $region6: #{tpu_custom_call.1} parent=1 // loop_footer
      %s22 = sadd.s32 1, %s18
    $region7: #{tpu_custom_call.1} parent=1 // loop_footer_branch
      %17 = sbr.rel target = $region3
    $region8: #{tpu_custom_call.1} parent=1 // loop_exit
      _
    %2071 = vsyncpa [#allocation4], 1
    %s2072 = scalar_lea.sflag [#allocation4], 1
    %2073 = vsyncpa %s2072, 1
    %2074 = vsyncpa [#allocation7], 1
    %2075 = vsyncpa [#allocation5], 1
    %s2076 = scalar_lea.sflag [#allocation5], 1
    %2077 = vsyncpa %s2076, 1

</llo_original>
